<compile_context>
chip_gen: v6e
topology: v6e:2x2x1
jax: 0.10.0
libtpu: 0.0.40
codegen_flags: <defaults>
</compile_context>

<pallas_src>
import math

import jax
import jax.numpy as jnp
from jax.experimental import pallas as pl
from jax.experimental.pallas import tpu as pltpu

# ---------------- small config ----------------
B, S, H = 2, 8, 32          # batch, seq, hidden
M = B * S                   # flattened row count
NH = 2                      # attention heads
HD = H // NH                # head dim
I = 4 * H                   # intermediate size
NTINY = 4                   # number of TinyAttention modules
ATTN_EMBD = 1               # tiny-attention embedding dim
LN_EPS = 1e-12              # Roberta layer_norm_eps
NEG_INF = -1e9              # cross-batch additive mask for the flattened attention


# ---------------- in-kernel math helpers ----------------
def _gelu(x):
    # tanh-approximate GELU (EUP tanh) instead of the erf polynomial (VALU chain).
    c = 0.7978845608028654  # sqrt(2/pi)
    return 0.5 * x * (1.0 + jnp.tanh(c * (x + 0.044715 * x * x * x)))


def _softmax(x):
    m = jnp.max(x, axis=-1, keepdims=True)
    e = jnp.exp(x - m)
    # approx reciprocal lowers to the EUP slot instead of a VALU divide
    return e * pl.reciprocal(jnp.sum(e, axis=-1, keepdims=True), approx=True)


def _layernorm(x, g, b):
    mu = jnp.mean(x, axis=-1, keepdims=True)
    xc = x - mu
    var = jnp.mean(xc * xc, axis=-1, keepdims=True)
    return xc * jax.lax.rsqrt(var + LN_EPS) * g + b


def _mm(a, w_bf16):
    # bf16 operands (weights are pre-cast host-side), f32 accumulation on the MXU.
    return jnp.dot(a.astype(jnp.bfloat16), w_bf16, preferred_element_type=jnp.float32)


# ---------------- the fused kernel (whole problem, no grid) ----------------
def roberta_layer_ada_kernel(
    x_ref, amask_ref, omask_ref, eye_ref,
    wqkv_ref, bqkv_ref, wao_ref, bao_ref, ln1g_ref, ln1b_ref,
    twqkv_ref, tbqkv_ref, twproj_ref, tbproj_ref,
    wi_ref, bi_ref, wff_ref, bff_ref, ln2g_ref, ln2b_ref,
    out_ref,
):
    f32 = jnp.float32
    bf16 = jnp.bfloat16

    xf = x_ref[...]                 # (M, H) f32, batch flattened into rows
    amask = amask_ref[...]          # (M, M) block-diagonal additive self-attn mask
    omask = omask_ref[...]          # (M, M) block-diagonal additive tiny-attn mask
    eye = eye_ref[...]              # (M, M) f32 identity (VPU/XLU col->row relayout)

    # ---- RobertaSelfAttention: fused QKV projection (Q pre-scaled by 1/sqrt(HD)) ----
    qkv = _mm(xf, wqkv_ref[...]) + bqkv_ref[...]            # (M, 3H) f32

    ctx_heads = []
    for h in range(NH):
        qh = qkv[:, h * HD:(h + 1) * HD].astype(bf16)               # (M, HD)
        kh = qkv[:, H + h * HD:H + (h + 1) * HD].astype(bf16)       # (M, HD)
        vh = qkv[:, 2 * H + h * HD:2 * H + (h + 1) * HD].astype(bf16)
        # both batches fused into one 2-D bf16 matmul per head; mask is pre-broadcast
        sc = jnp.einsum("qd,kd->qk", qh, kh, preferred_element_type=f32) + amask
        pr = _softmax(sc)                                            # (M, M)
        ctx_heads.append(jnp.dot(pr.astype(bf16), vh,
                                 preferred_element_type=f32))        # (M, HD)
    # single output projection instead of per-head K=16 matmuls + VPU accumulation
    ctx = jnp.concatenate(ctx_heads, axis=-1)                        # (M, H)
    attn_dense = _mm(ctx, wao_ref[...]) + bao_ref[...]               # (M, H)

    # RobertaSelfOutput: dense + (dropout=id) + residual + LayerNorm
    a = _layernorm(attn_dense + xf, ln1g_ref[...], ln1b_ref[...])    # (M, H)

    # ---- 4 x TinyAttention residual updates (attention_embd == 1, all VPU/XLU) ----
    for t in range(NTINY):
        qkv3 = _mm(a, twqkv_ref[t]) + tbqkv_ref[t]                   # (M, 3)
        tq = qkv3[:, 0:1]                                            # (M, 1)
        # column -> row relayout via identity multiply + sublane reduce (no MXU push)
        tk_row = jnp.sum(qkv3[:, 1:2] * eye, axis=0, keepdims=True)  # (1, M)
        tv_row = jnp.sum(qkv3[:, 2:3] * eye, axis=0, keepdims=True)  # (1, M)
        # scale = 1/sqrt(ATTN_EMBD) = 1.0
        s = tq * tk_row + omask                                      # VPU outer product
        p = _softmax(s)                                              # (M, M)
        o = jnp.sum(p * tv_row, axis=-1, keepdims=True)              # (M, 1) XLU k-sum
        # twproj / tbproj are pre-scaled by 0.25 (residual /4 folded host-side)
        a = a + (o * twproj_ref[t] + tbproj_ref[t])                  # (M, H)

    # ---- RobertaIntermediate (dense + GELU) + RobertaOutput (dense + res + LN) ----
    inter = _gelu(_mm(a, wi_ref[...]) + bi_ref[...])                 # (M, I)
    ff = _mm(inter, wff_ref[...]) + bff_ref[...]                     # (M, H)
    out_ref[...] = _layernorm(ff + a, ln2g_ref[...], ln2b_ref[...])


# ---------------- host-side, one-time weight fusion ----------------
def fuse_params(p):
    """QKV concat, 1/sqrt(HD) and 0.25 constant folds, bf16 pre-cast. Call once."""
    inv = 1.0 / math.sqrt(HD)
    wqkv = jnp.concatenate([p["wq"] * inv, p["wk"], p["wv"]], axis=1).astype(jnp.bfloat16)
    bqkv = jnp.concatenate([p["bq"] * inv, p["bk"], p["bv"]], axis=1)         # f32
    return {
        "wqkv": wqkv, "bqkv": bqkv,
        "wao": p["wao"].astype(jnp.bfloat16), "bao": p["bao"],
        "ln1g": p["ln1g"], "ln1b": p["ln1b"],
        "twqkv": p["twqkv"].astype(jnp.bfloat16), "tbqkv": p["tbqkv"],
        "twproj": p["twproj"] * 0.25, "tbproj": p["tbproj"] * 0.25,  # residual /4 folded
        "wi": p["wi"].astype(jnp.bfloat16), "bi": p["bi"],
        "wff": p["wff"].astype(jnp.bfloat16), "bff": p["bff"],
        "ln2g": p["ln2g"], "ln2b": p["ln2b"],
    }


def _flat_block_mask(mask):
    """(B,1,S) HF additive mask -> (M,M) block-diagonal additive mask for the
    batch-flattened attention. Cross-batch pairs get NEG_INF -> exactly 0 prob."""
    key = jnp.broadcast_to(mask.reshape(B, 1, 1, S), (B, S, B, S))   # [b,q,b',k] = mask[b,0,k]
    same = jnp.arange(B)[:, None, None, None] == jnp.arange(B)[None, None, :, None]
    return jnp.where(same, key, NEG_INF).reshape(M, M).astype(jnp.float32)


# ---------------- jitted forward wrapper ----------------
@jax.jit
def roberta_layer_ada(x, attn_mask, old_mask, fp):
    xf = x.reshape(M, H)
    amask = _flat_block_mask(attn_mask)
    omask = _flat_block_mask(old_mask)
    eye = jnp.eye(M, dtype=jnp.float32)

    args = (
        xf, amask, omask, eye,
        fp["wqkv"], fp["bqkv"], fp["wao"], fp["bao"], fp["ln1g"], fp["ln1b"],
        fp["twqkv"], fp["tbqkv"], fp["twproj"], fp["tbproj"],
        fp["wi"], fp["bi"], fp["wff"], fp["bff"], fp["ln2g"], fp["ln2b"],
    )

    # No grid: whole arrays live in VMEM for the single invocation (total footprint is
    # tens of KB, far below VMEM on any TPU generation). Memory space made explicit.
    vmem = pl.BlockSpec(memory_space=pltpu.MemorySpace.VMEM)
    out = pl.pallas_call(
        roberta_layer_ada_kernel,
        out_shape=jax.ShapeDtypeStruct((M, H), jnp.float32),
        in_specs=[vmem] * len(args),
        out_specs=vmem,
    )(*args)
    # TODO(synk): lane-dense (B, S*H) output layout skipped; output is 2 KB so the
    # masked-store epilogue is noise at this size (measure before paying the relayout).
    return out.reshape(B, S, H)


# ---------------- pure-JAX reference (for sanity check) ----------------
def reference(x, amask, omask, p):
    def ln(h, g, b):
        mu = h.mean(-1, keepdims=True)
        var = ((h - mu) ** 2).mean(-1, keepdims=True)
        return (h - mu) / jnp.sqrt(var + LN_EPS) * g + b

    q = x @ p["wq"] + p["bq"][0]
    k = x @ p["wk"] + p["bk"][0]
    v = x @ p["wv"] + p["bv"][0]
    qh = q.reshape(B, S, NH, HD).transpose(0, 2, 1, 3)
    kh = k.reshape(B, S, NH, HD).transpose(0, 2, 1, 3)
    vh = v.reshape(B, S, NH, HD).transpose(0, 2, 1, 3)
    s = jnp.einsum("bhqd,bhkd->bhqk", qh, kh) / math.sqrt(HD)
    s = s + amask[:, None, :, :]
    probs = jax.nn.softmax(s, axis=-1)
    ctx = jnp.einsum("bhqk,bhkd->bhqd", probs, vh).transpose(0, 2, 1, 3).reshape(B, S, H)
    attn = ln(ctx @ p["wao"] + p["bao"][0] + x, p["ln1g"][0], p["ln1b"][0])

    a = attn
    for t in range(NTINY):
        qkv = a @ p["twqkv"][t] + p["tbqkv"][t, 0]
        tq, tk, tv = qkv[..., 0:1], qkv[..., 1:2], qkv[..., 2:3]
        s2 = jnp.einsum("bqe,bke->bqk", tq, tk) / math.sqrt(ATTN_EMBD) + omask
        p2 = jax.nn.softmax(s2, axis=-1)
        o = jnp.einsum("bqk,bke->bqe", p2, tv)
        tiny = o @ p["twproj"][t] + p["tbproj"][t, 0]
        a = a + tiny / 4.0

    inter = jax.nn.gelu(a @ p["wi"] + p["bi"][0], approximate=False)
    ff = inter @ p["wff"] + p["bff"][0]
    return ln(ff + a, p["ln2g"][0], p["ln2b"][0])


# ---------------- main ----------------
if __name__ == "__main__":
    key = jax.random.PRNGKey(0)
    ks = list(jax.random.split(key, 32))

    def nrm(k, shape, scale=0.05):
        return (scale * jax.random.normal(k, shape)).astype(jnp.float32)

    params = {
        "wq": nrm(ks[0], (H, H)),   "bq": nrm(ks[1], (1, H), 0.02),
        "wk": nrm(ks[2], (H, H)),   "bk": nrm(ks[3], (1, H), 0.02),
        "wv": nrm(ks[4], (H, H)),   "bv": nrm(ks[5], (1, H), 0.02),
        "wao": nrm(ks[6], (H, H)),  "bao": nrm(ks[7], (1, H), 0.02),
        "ln1g": (1.0 + nrm(ks[8], (1, H), 0.1)), "ln1b": nrm(ks[9], (1, H), 0.1),
        "twqkv": nrm(ks[10], (NTINY, H, 3 * ATTN_EMBD)),
        "tbqkv": nrm(ks[11], (NTINY, 1, 3 * ATTN_EMBD), 0.02),
        "twproj": nrm(ks[12], (NTINY, ATTN_EMBD, H)),
        "tbproj": nrm(ks[13], (NTINY, 1, H), 0.02),
        "wi": nrm(ks[14], (H, I)),  "bi": nrm(ks[15], (1, I), 0.02),
        "wff": nrm(ks[16], (I, H)), "bff": nrm(ks[17], (1, H), 0.02),
        "ln2g": (1.0 + nrm(ks[18], (1, H), 0.1)), "ln2b": nrm(ks[19], (1, H), 0.1),
    }

    x = jax.random.normal(ks[20], (B, S, H), dtype=jnp.float32)

    # additive masks (0 = keep, -10000 = masked), HF extended-mask convention
    attn_mask = jnp.zeros((B, 1, S), jnp.float32).at[1, 0, S - 2:].set(-10000.0)
    old_mask = jnp.zeros((B, 1, S), jnp.float32).at[0, 0, S - 1:].set(-10000.0)

    fused = fuse_params(params)                 # one-time weight fusion / bf16 pre-cast
    out = roberta_layer_ada(x, attn_mask, old_mask, fused)
    out = jax.block_until_ready(out)

    ref = reference(x, attn_mask, old_mask, params)
    max_diff = float(jnp.max(jnp.abs(out - ref)))
    assert out.shape == (B, S, H)
    assert max_diff < 2e-2, f"mismatch vs reference: {max_diff}"

    print("KERNEL_OK")
</pallas_src>

<mosaic_0001>
module attributes {stable_mosaic.version = 11 : i64} {
  func.func @roberta_layer_ada_kernel(%arg0: memref<16x32xf32, #tpu.memory_space<vmem>>, %arg1: memref<16x16xf32, #tpu.memory_space<vmem>>, %arg2: memref<16x16xf32, #tpu.memory_space<vmem>>, %arg3: memref<16x16xf32, #tpu.memory_space<vmem>>, %arg4: memref<32x96xbf16, #tpu.memory_space<vmem>>, %arg5: memref<1x96xf32, #tpu.memory_space<vmem>>, %arg6: memref<32x32xbf16, #tpu.memory_space<vmem>>, %arg7: memref<1x32xf32, #tpu.memory_space<vmem>>, %arg8: memref<1x32xf32, #tpu.memory_space<vmem>>, %arg9: memref<1x32xf32, #tpu.memory_space<vmem>>, %arg10: memref<4x32x3xbf16, #tpu.memory_space<vmem>>, %arg11: memref<4x1x3xf32, #tpu.memory_space<vmem>>, %arg12: memref<4x1x32xf32, #tpu.memory_space<vmem>>, %arg13: memref<4x1x32xf32, #tpu.memory_space<vmem>>, %arg14: memref<32x128xbf16, #tpu.memory_space<vmem>>, %arg15: memref<1x128xf32, #tpu.memory_space<vmem>>, %arg16: memref<128x32xbf16, #tpu.memory_space<vmem>>, %arg17: memref<1x32xf32, #tpu.memory_space<vmem>>, %arg18: memref<1x32xf32, #tpu.memory_space<vmem>>, %arg19: memref<1x32xf32, #tpu.memory_space<vmem>>, %arg20: memref<16x32xf32, #tpu.memory_space<vmem>>) attributes {dimension_semantics = [], scalar_prefetch = 0 : i64, scratch_operands = 0 : i64, tpu.core_type = #tpu.core_type<tc>} {
    %c0 = arith.constant 0 : index
    %c0_0 = arith.constant 0 : index
    %0 = vector.load %arg0[%c0, %c0_0] : memref<16x32xf32, #tpu.memory_space<vmem>>, vector<16x32xf32>
    %c0_1 = arith.constant 0 : index
    %c0_2 = arith.constant 0 : index
    %1 = vector.load %arg1[%c0_1, %c0_2] : memref<16x16xf32, #tpu.memory_space<vmem>>, vector<16x16xf32>
    %c0_3 = arith.constant 0 : index
    %c0_4 = arith.constant 0 : index
    %2 = vector.load %arg2[%c0_3, %c0_4] : memref<16x16xf32, #tpu.memory_space<vmem>>, vector<16x16xf32>
    %c0_5 = arith.constant 0 : index
    %c0_6 = arith.constant 0 : index
    %3 = vector.load %arg3[%c0_5, %c0_6] : memref<16x16xf32, #tpu.memory_space<vmem>>, vector<16x16xf32>
    %c0_7 = arith.constant 0 : index
    %c0_8 = arith.constant 0 : index
    %4 = vector.load %arg4[%c0_7, %c0_8] : memref<32x96xbf16, #tpu.memory_space<vmem>>, vector<32x96xbf16>
    %5 = arith.truncf %0 : vector<16x32xf32> to vector<16x32xbf16>
    %cst = arith.constant dense<0.000000e+00> : vector<16x96xf32>
    %6 = tpu.matmul %5, %4, %cst {dimension_numbers = #tpu.dot_dimension_numbers<[1], [0], [0], [1], [0, 0, 1, 1], [], []>} : vector<16x32xbf16>, vector<32x96xbf16>, vector<16x96xf32> -> vector<16x96xf32>
    %c0_9 = arith.constant 0 : index
    %c0_10 = arith.constant 0 : index
    %7 = vector.load %arg5[%c0_9, %c0_10] : memref<1x96xf32, #tpu.memory_space<vmem>>, vector<1x96xf32>
    %8 = vector.broadcast %7 : vector<1x96xf32> to vector<16x96xf32>
    %9 = arith.addf %6, %8 : vector<16x96xf32>
    %10 = vector.extract_strided_slice %9 {offsets = [0, 0], sizes = [16, 16], strides = [1, 1]} : vector<16x96xf32> to vector<16x16xf32>
    %11 = arith.truncf %10 : vector<16x16xf32> to vector<16x16xbf16>
    %12 = vector.extract_strided_slice %9 {offsets = [0, 32], sizes = [16, 16], strides = [1, 1]} : vector<16x96xf32> to vector<16x16xf32>
    %13 = arith.truncf %12 : vector<16x16xf32> to vector<16x16xbf16>
    %14 = vector.extract_strided_slice %9 {offsets = [0, 64], sizes = [16, 16], strides = [1, 1]} : vector<16x96xf32> to vector<16x16xf32>
    %15 = arith.truncf %14 : vector<16x16xf32> to vector<16x16xbf16>
    "tpu.trace_start"() <{level = 10 : i32, message = "qd,kd->qk"}> : () -> ()
    %cst_11 = arith.constant dense<0.000000e+00> : vector<16x16xf32>
    %16 = tpu.matmul %11, %13, %cst_11 {dimension_numbers = #tpu.dot_dimension_numbers<[1], [1], [0], [0], [0, 0, 1, 0], [], []>} : vector<16x16xbf16>, vector<16x16xbf16>, vector<16x16xf32> -> vector<16x16xf32>
    "tpu.trace_stop"() : () -> ()
    %17 = arith.addf %16, %1 : vector<16x16xf32>
    %cst_12 = arith.constant dense<0xFF800000> : vector<16xf32>
    %18 = vector.multi_reduction <maximumf>, %17, %cst_12 [1] : vector<16x16xf32> to vector<16xf32>
    %19 = vector.shape_cast %18 : vector<16xf32> to vector<16x1xf32>
    %20 = vector.broadcast %19 : vector<16x1xf32> to vector<16x16xf32>
    %21 = arith.subf %17, %20 : vector<16x16xf32>
    %22 = math.exp %21 : vector<16x16xf32>
    %cst_13 = arith.constant dense<0.000000e+00> : vector<16xf32>
    %23 = vector.multi_reduction <add>, %22, %cst_13 [1] : vector<16x16xf32> to vector<16xf32>
    %24 = vector.shape_cast %23 : vector<16xf32> to vector<16x1xf32>
    %25 = tpu.reciprocal %24 {approx = true} : vector<16x1xf32> -> vector<16x1xf32>
    %26 = vector.broadcast %25 : vector<16x1xf32> to vector<16x16xf32>
    %27 = arith.mulf %22, %26 : vector<16x16xf32>
    %28 = arith.truncf %27 : vector<16x16xf32> to vector<16x16xbf16>
    %cst_14 = arith.constant dense<0.000000e+00> : vector<16x16xf32>
    %29 = tpu.matmul %28, %15, %cst_14 {dimension_numbers = #tpu.dot_dimension_numbers<[1], [0], [0], [1], [0, 0, 1, 1], [], []>} : vector<16x16xbf16>, vector<16x16xbf16>, vector<16x16xf32> -> vector<16x16xf32>
    %30 = vector.extract_strided_slice %9 {offsets = [0, 16], sizes = [16, 16], strides = [1, 1]} : vector<16x96xf32> to vector<16x16xf32>
    %31 = arith.truncf %30 : vector<16x16xf32> to vector<16x16xbf16>
    %32 = vector.extract_strided_slice %9 {offsets = [0, 48], sizes = [16, 16], strides = [1, 1]} : vector<16x96xf32> to vector<16x16xf32>
    %33 = arith.truncf %32 : vector<16x16xf32> to vector<16x16xbf16>
    %34 = vector.extract_strided_slice %9 {offsets = [0, 80], sizes = [16, 16], strides = [1, 1]} : vector<16x96xf32> to vector<16x16xf32>
    %35 = arith.truncf %34 : vector<16x16xf32> to vector<16x16xbf16>
    "tpu.trace_start"() <{level = 10 : i32, message = "qd,kd->qk"}> : () -> ()
    %cst_15 = arith.constant dense<0.000000e+00> : vector<16x16xf32>
    %36 = tpu.matmul %31, %33, %cst_15 {dimension_numbers = #tpu.dot_dimension_numbers<[1], [1], [0], [0], [0, 0, 1, 0], [], []>} : vector<16x16xbf16>, vector<16x16xbf16>, vector<16x16xf32> -> vector<16x16xf32>
    "tpu.trace_stop"() : () -> ()
    %37 = arith.addf %36, %1 : vector<16x16xf32>
    %cst_16 = arith.constant dense<0xFF800000> : vector<16xf32>
    %38 = vector.multi_reduction <maximumf>, %37, %cst_16 [1] : vector<16x16xf32> to vector<16xf32>
    %39 = vector.shape_cast %38 : vector<16xf32> to vector<16x1xf32>
    %40 = vector.broadcast %39 : vector<16x1xf32> to vector<16x16xf32>
    %41 = arith.subf %37, %40 : vector<16x16xf32>
    %42 = math.exp %41 : vector<16x16xf32>
    %cst_17 = arith.constant dense<0.000000e+00> : vector<16xf32>
    %43 = vector.multi_reduction <add>, %42, %cst_17 [1] : vector<16x16xf32> to vector<16xf32>
    %44 = vector.shape_cast %43 : vector<16xf32> to vector<16x1xf32>
    %45 = tpu.reciprocal %44 {approx = true} : vector<16x1xf32> -> vector<16x1xf32>
    %46 = vector.broadcast %45 : vector<16x1xf32> to vector<16x16xf32>
    %47 = arith.mulf %42, %46 : vector<16x16xf32>
    %48 = arith.truncf %47 : vector<16x16xf32> to vector<16x16xbf16>
    %cst_18 = arith.constant dense<0.000000e+00> : vector<16x16xf32>
    %49 = tpu.matmul %48, %35, %cst_18 {dimension_numbers = #tpu.dot_dimension_numbers<[1], [0], [0], [1], [0, 0, 1, 1], [], []>} : vector<16x16xbf16>, vector<16x16xbf16>, vector<16x16xf32> -> vector<16x16xf32>
    %50 = tpu.concatenate %29, %49 in 1 : vector<16x16xf32>, vector<16x16xf32> -> vector<16x32xf32>
    %c0_19 = arith.constant 0 : index
    %c0_20 = arith.constant 0 : index
    %51 = vector.load %arg6[%c0_19, %c0_20] : memref<32x32xbf16, #tpu.memory_space<vmem>>, vector<32x32xbf16>
    %52 = arith.truncf %50 : vector<16x32xf32> to vector<16x32xbf16>
    %cst_21 = arith.constant dense<0.000000e+00> : vector<16x32xf32>
    %53 = tpu.matmul %52, %51, %cst_21 {dimension_numbers = #tpu.dot_dimension_numbers<[1], [0], [0], [1], [0, 0, 1, 1], [], []>} : vector<16x32xbf16>, vector<32x32xbf16>, vector<16x32xf32> -> vector<16x32xf32>
    %c0_22 = arith.constant 0 : index
    %c0_23 = arith.constant 0 : index
    %54 = vector.load %arg7[%c0_22, %c0_23] : memref<1x32xf32, #tpu.memory_space<vmem>>, vector<1x32xf32>
    %55 = vector.broadcast %54 : vector<1x32xf32> to vector<16x32xf32>
    %56 = arith.addf %53, %55 : vector<16x32xf32>
    %57 = arith.addf %56, %0 : vector<16x32xf32>
    %c0_24 = arith.constant 0 : index
    %c0_25 = arith.constant 0 : index
    %58 = vector.load %arg8[%c0_24, %c0_25] : memref<1x32xf32, #tpu.memory_space<vmem>>, vector<1x32xf32>
    %c0_26 = arith.constant 0 : index
    %c0_27 = arith.constant 0 : index
    %59 = vector.load %arg9[%c0_26, %c0_27] : memref<1x32xf32, #tpu.memory_space<vmem>>, vector<1x32xf32>
    %cst_28 = arith.constant dense<0.000000e+00> : vector<16xf32>
    %60 = vector.multi_reduction <add>, %57, %cst_28 [1] : vector<16x32xf32> to vector<16xf32>
    %61 = vector.shape_cast %60 : vector<16xf32> to vector<16x1xf32>
    %cst_29 = arith.constant 3.200000e+01 : f32
    %62 = vector.broadcast %cst_29 : f32 to vector<16x1xf32>
    %63 = arith.divf %61, %62 : vector<16x1xf32>
    %64 = vector.broadcast %63 : vector<16x1xf32> to vector<16x32xf32>
    %65 = arith.subf %57, %64 : vector<16x32xf32>
    %66 = arith.mulf %65, %65 : vector<16x32xf32>
    %cst_30 = arith.constant dense<0.000000e+00> : vector<16xf32>
    %67 = vector.multi_reduction <add>, %66, %cst_30 [1] : vector<16x32xf32> to vector<16xf32>
    %68 = vector.shape_cast %67 : vector<16xf32> to vector<16x1xf32>
    %cst_31 = arith.constant 3.200000e+01 : f32
    %69 = vector.broadcast %cst_31 : f32 to vector<16x1xf32>
    %70 = arith.divf %68, %69 : vector<16x1xf32>
    %cst_32 = arith.constant 9.99999996E-13 : f32
    %71 = vector.broadcast %cst_32 : f32 to vector<16x1xf32>
    %72 = arith.addf %70, %71 : vector<16x1xf32>
    %73 = math.rsqrt %72 : vector<16x1xf32>
    %74 = vector.broadcast %73 : vector<16x1xf32> to vector<16x32xf32>
    %75 = arith.mulf %65, %74 : vector<16x32xf32>
    %76 = vector.broadcast %58 : vector<1x32xf32> to vector<16x32xf32>
    %77 = arith.mulf %75, %76 : vector<16x32xf32>
    %78 = vector.broadcast %59 : vector<1x32xf32> to vector<16x32xf32>
    %79 = arith.addf %77, %78 : vector<16x32xf32>
    %c0_33 = arith.constant 0 : index
    %c0_34 = arith.constant 0 : index
    %c0_35 = arith.constant 0 : index
    %80 = vector.load %arg10[%c0_33, %c0_34, %c0_35] : memref<4x32x3xbf16, #tpu.memory_space<vmem>>, vector<1x32x3xbf16>
    %81 = vector.shape_cast %80 : vector<1x32x3xbf16> to vector<32x3xbf16>
    %82 = arith.truncf %79 : vector<16x32xf32> to vector<16x32xbf16>
    %cst_36 = arith.constant dense<0.000000e+00> : vector<16x3xf32>
    %83 = tpu.matmul %82, %81, %cst_36 {dimension_numbers = #tpu.dot_dimension_numbers<[1], [0], [0], [1], [0, 0, 1, 1], [], []>} : vector<16x32xbf16>, vector<32x3xbf16>, vector<16x3xf32> -> vector<16x3xf32>
    %c0_37 = arith.constant 0 : index
    %c0_38 = arith.constant 0 : index
    %c0_39 = arith.constant 0 : index
    %84 = vector.load %arg11[%c0_37, %c0_38, %c0_39] : memref<4x1x3xf32, #tpu.memory_space<vmem>>, vector<1x1x3xf32>
    %85 = vector.shape_cast %84 : vector<1x1x3xf32> to vector<1x3xf32>
    %86 = vector.broadcast %85 : vector<1x3xf32> to vector<16x3xf32>
    %87 = arith.addf %83, %86 : vector<16x3xf32>
    %88 = vector.extract_strided_slice %87 {offsets = [0, 0], sizes = [16, 1], strides = [1, 1]} : vector<16x3xf32> to vector<16x1xf32>
    %89 = vector.extract_strided_slice %87 {offsets = [0, 1], sizes = [16, 1], strides = [1, 1]} : vector<16x3xf32> to vector<16x1xf32>
    %90 = vector.broadcast %89 : vector<16x1xf32> to vector<16x16xf32>
    %91 = arith.mulf %90, %3 : vector<16x16xf32>
    %cst_40 = arith.constant dense<0.000000e+00> : vector<16xf32>
    %92 = vector.multi_reduction <add>, %91, %cst_40 [0] : vector<16x16xf32> to vector<16xf32>
    %93 = vector.shape_cast %92 : vector<16xf32> to vector<1x16xf32>
    %94 = vector.extract_strided_slice %87 {offsets = [0, 2], sizes = [16, 1], strides = [1, 1]} : vector<16x3xf32> to vector<16x1xf32>
    %95 = vector.broadcast %94 : vector<16x1xf32> to vector<16x16xf32>
    %96 = arith.mulf %95, %3 : vector<16x16xf32>
    %cst_41 = arith.constant dense<0.000000e+00> : vector<16xf32>
    %97 = vector.multi_reduction <add>, %96, %cst_41 [0] : vector<16x16xf32> to vector<16xf32>
    %98 = vector.shape_cast %97 : vector<16xf32> to vector<1x16xf32>
    %99 = vector.broadcast %88 : vector<16x1xf32> to vector<16x16xf32>
    %100 = vector.broadcast %93 : vector<1x16xf32> to vector<16x16xf32>
    %101 = arith.mulf %99, %100 : vector<16x16xf32>
    %102 = arith.addf %101, %2 : vector<16x16xf32>
    %cst_42 = arith.constant dense<0xFF800000> : vector<16xf32>
    %103 = vector.multi_reduction <maximumf>, %102, %cst_42 [1] : vector<16x16xf32> to vector<16xf32>
    %104 = vector.shape_cast %103 : vector<16xf32> to vector<16x1xf32>
    %105 = vector.broadcast %104 : vector<16x1xf32> to vector<16x16xf32>
    %106 = arith.subf %102, %105 : vector<16x16xf32>
    %107 = math.exp %106 : vector<16x16xf32>
    %cst_43 = arith.constant dense<0.000000e+00> : vector<16xf32>
    %108 = vector.multi_reduction <add>, %107, %cst_43 [1] : vector<16x16xf32> to vector<16xf32>
    %109 = vector.shape_cast %108 : vector<16xf32> to vector<16x1xf32>
    %110 = tpu.reciprocal %109 {approx = true} : vector<16x1xf32> -> vector<16x1xf32>
    %111 = vector.broadcast %110 : vector<16x1xf32> to vector<16x16xf32>
    %112 = arith.mulf %107, %111 : vector<16x16xf32>
    %113 = vector.broadcast %98 : vector<1x16xf32> to vector<16x16xf32>
    %114 = arith.mulf %112, %113 : vector<16x16xf32>
    %cst_44 = arith.constant dense<0.000000e+00> : vector<16xf32>
    %115 = vector.multi_reduction <add>, %114, %cst_44 [1] : vector<16x16xf32> to vector<16xf32>
    %116 = vector.shape_cast %115 : vector<16xf32> to vector<16x1xf32>
    %c0_45 = arith.constant 0 : index
    %c0_46 = arith.constant 0 : index
    %c0_47 = arith.constant 0 : index
    %117 = vector.load %arg12[%c0_45, %c0_46, %c0_47] : memref<4x1x32xf32, #tpu.memory_space<vmem>>, vector<1x1x32xf32>
    %118 = vector.shape_cast %117 : vector<1x1x32xf32> to vector<1x32xf32>
    %119 = vector.broadcast %116 : vector<16x1xf32> to vector<16x32xf32>
    %120 = vector.broadcast %118 : vector<1x32xf32> to vector<16x32xf32>
    %121 = arith.mulf %119, %120 : vector<16x32xf32>
    %c0_48 = arith.constant 0 : index
    %c0_49 = arith.constant 0 : index
    %c0_50 = arith.constant 0 : index
    %122 = vector.load %arg13[%c0_48, %c0_49, %c0_50] : memref<4x1x32xf32, #tpu.memory_space<vmem>>, vector<1x1x32xf32>
    %123 = vector.shape_cast %122 : vector<1x1x32xf32> to vector<1x32xf32>
    %124 = vector.broadcast %123 : vector<1x32xf32> to vector<16x32xf32>
    %125 = arith.addf %121, %124 : vector<16x32xf32>
    %126 = arith.addf %79, %125 : vector<16x32xf32>
    %c1 = arith.constant 1 : index
    %c0_51 = arith.constant 0 : index
    %c0_52 = arith.constant 0 : index
    %127 = vector.load %arg10[%c1, %c0_51, %c0_52] : memref<4x32x3xbf16, #tpu.memory_space<vmem>>, vector<1x32x3xbf16>
    %128 = vector.shape_cast %127 : vector<1x32x3xbf16> to vector<32x3xbf16>
    %129 = arith.truncf %126 : vector<16x32xf32> to vector<16x32xbf16>
    %cst_53 = arith.constant dense<0.000000e+00> : vector<16x3xf32>
    %130 = tpu.matmul %129, %128, %cst_53 {dimension_numbers = #tpu.dot_dimension_numbers<[1], [0], [0], [1], [0, 0, 1, 1], [], []>} : vector<16x32xbf16>, vector<32x3xbf16>, vector<16x3xf32> -> vector<16x3xf32>
    %c1_54 = arith.constant 1 : index
    %c0_55 = arith.constant 0 : index
    %c0_56 = arith.constant 0 : index
    %131 = vector.load %arg11[%c1_54, %c0_55, %c0_56] : memref<4x1x3xf32, #tpu.memory_space<vmem>>, vector<1x1x3xf32>
    %132 = vector.shape_cast %131 : vector<1x1x3xf32> to vector<1x3xf32>
    %133 = vector.broadcast %132 : vector<1x3xf32> to vector<16x3xf32>
    %134 = arith.addf %130, %133 : vector<16x3xf32>
    %135 = vector.extract_strided_slice %134 {offsets = [0, 0], sizes = [16, 1], strides = [1, 1]} : vector<16x3xf32> to vector<16x1xf32>
    %136 = vector.extract_strided_slice %134 {offsets = [0, 1], sizes = [16, 1], strides = [1, 1]} : vector<16x3xf32> to vector<16x1xf32>
    %137 = vector.broadcast %136 : vector<16x1xf32> to vector<16x16xf32>
    %138 = arith.mulf %137, %3 : vector<16x16xf32>
    %cst_57 = arith.constant dense<0.000000e+00> : vector<16xf32>
    %139 = vector.multi_reduction <add>, %138, %cst_57 [0] : vector<16x16xf32> to vector<16xf32>
    %140 = vector.shape_cast %139 : vector<16xf32> to vector<1x16xf32>
    %141 = vector.extract_strided_slice %134 {offsets = [0, 2], sizes = [16, 1], strides = [1, 1]} : vector<16x3xf32> to vector<16x1xf32>
    %142 = vector.broadcast %141 : vector<16x1xf32> to vector<16x16xf32>
    %143 = arith.mulf %142, %3 : vector<16x16xf32>
    %cst_58 = arith.constant dense<0.000000e+00> : vector<16xf32>
    %144 = vector.multi_reduction <add>, %143, %cst_58 [0] : vector<16x16xf32> to vector<16xf32>
    %145 = vector.shape_cast %144 : vector<16xf32> to vector<1x16xf32>
    %146 = vector.broadcast %135 : vector<16x1xf32> to vector<16x16xf32>
    %147 = vector.broadcast %140 : vector<1x16xf32> to vector<16x16xf32>
    %148 = arith.mulf %146, %147 : vector<16x16xf32>
    %149 = arith.addf %148, %2 : vector<16x16xf32>
    %cst_59 = arith.constant dense<0xFF800000> : vector<16xf32>
    %150 = vector.multi_reduction <maximumf>, %149, %cst_59 [1] : vector<16x16xf32> to vector<16xf32>
    %151 = vector.shape_cast %150 : vector<16xf32> to vector<16x1xf32>
    %152 = vector.broadcast %151 : vector<16x1xf32> to vector<16x16xf32>
    %153 = arith.subf %149, %152 : vector<16x16xf32>
    %154 = math.exp %153 : vector<16x16xf32>
    %cst_60 = arith.constant dense<0.000000e+00> : vector<16xf32>
    %155 = vector.multi_reduction <add>, %154, %cst_60 [1] : vector<16x16xf32> to vector<16xf32>
    %156 = vector.shape_cast %155 : vector<16xf32> to vector<16x1xf32>
    %157 = tpu.reciprocal %156 {approx = true} : vector<16x1xf32> -> vector<16x1xf32>
    %158 = vector.broadcast %157 : vector<16x1xf32> to vector<16x16xf32>
    %159 = arith.mulf %154, %158 : vector<16x16xf32>
    %160 = vector.broadcast %145 : vector<1x16xf32> to vector<16x16xf32>
    %161 = arith.mulf %159, %160 : vector<16x16xf32>
    %cst_61 = arith.constant dense<0.000000e+00> : vector<16xf32>
    %162 = vector.multi_reduction <add>, %161, %cst_61 [1] : vector<16x16xf32> to vector<16xf32>
    %163 = vector.shape_cast %162 : vector<16xf32> to vector<16x1xf32>
    %c1_62 = arith.constant 1 : index
    %c0_63 = arith.constant 0 : index
    %c0_64 = arith.constant 0 : index
    %164 = vector.load %arg12[%c1_62, %c0_63, %c0_64] : memref<4x1x32xf32, #tpu.memory_space<vmem>>, vector<1x1x32xf32>
    %165 = vector.shape_cast %164 : vector<1x1x32xf32> to vector<1x32xf32>
    %166 = vector.broadcast %163 : vector<16x1xf32> to vector<16x32xf32>
    %167 = vector.broadcast %165 : vector<1x32xf32> to vector<16x32xf32>
    %168 = arith.mulf %166, %167 : vector<16x32xf32>
    %c1_65 = arith.constant 1 : index
    %c0_66 = arith.constant 0 : index
    %c0_67 = arith.constant 0 : index
    %169 = vector.load %arg13[%c1_65, %c0_66, %c0_67] : memref<4x1x32xf32, #tpu.memory_space<vmem>>, vector<1x1x32xf32>
    %170 = vector.shape_cast %169 : vector<1x1x32xf32> to vector<1x32xf32>
    %171 = vector.broadcast %170 : vector<1x32xf32> to vector<16x32xf32>
    %172 = arith.addf %168, %171 : vector<16x32xf32>
    %173 = arith.addf %126, %172 : vector<16x32xf32>
    %c2 = arith.constant 2 : index
    %c0_68 = arith.constant 0 : index
    %c0_69 = arith.constant 0 : index
    %174 = vector.load %arg10[%c2, %c0_68, %c0_69] : memref<4x32x3xbf16, #tpu.memory_space<vmem>>, vector<1x32x3xbf16>
    %175 = vector.shape_cast %174 : vector<1x32x3xbf16> to vector<32x3xbf16>
    %176 = arith.truncf %173 : vector<16x32xf32> to vector<16x32xbf16>
    %cst_70 = arith.constant dense<0.000000e+00> : vector<16x3xf32>
    %177 = tpu.matmul %176, %175, %cst_70 {dimension_numbers = #tpu.dot_dimension_numbers<[1], [0], [0], [1], [0, 0, 1, 1], [], []>} : vector<16x32xbf16>, vector<32x3xbf16>, vector<16x3xf32> -> vector<16x3xf32>
    %c2_71 = arith.constant 2 : index
    %c0_72 = arith.constant 0 : index
    %c0_73 = arith.constant 0 : index
    %178 = vector.load %arg11[%c2_71, %c0_72, %c0_73] : memref<4x1x3xf32, #tpu.memory_space<vmem>>, vector<1x1x3xf32>
    %179 = vector.shape_cast %178 : vector<1x1x3xf32> to vector<1x3xf32>
    %180 = vector.broadcast %179 : vector<1x3xf32> to vector<16x3xf32>
    %181 = arith.addf %177, %180 : vector<16x3xf32>
    %182 = vector.extract_strided_slice %181 {offsets = [0, 0], sizes = [16, 1], strides = [1, 1]} : vector<16x3xf32> to vector<16x1xf32>
    %183 = vector.extract_strided_slice %181 {offsets = [0, 1], sizes = [16, 1], strides = [1, 1]} : vector<16x3xf32> to vector<16x1xf32>
    %184 = vector.broadcast %183 : vector<16x1xf32> to vector<16x16xf32>
    %185 = arith.mulf %184, %3 : vector<16x16xf32>
    %cst_74 = arith.constant dense<0.000000e+00> : vector<16xf32>
    %186 = vector.multi_reduction <add>, %185, %cst_74 [0] : vector<16x16xf32> to vector<16xf32>
    %187 = vector.shape_cast %186 : vector<16xf32> to vector<1x16xf32>
    %188 = vector.extract_strided_slice %181 {offsets = [0, 2], sizes = [16, 1], strides = [1, 1]} : vector<16x3xf32> to vector<16x1xf32>
    %189 = vector.broadcast %188 : vector<16x1xf32> to vector<16x16xf32>
    %190 = arith.mulf %189, %3 : vector<16x16xf32>
    %cst_75 = arith.constant dense<0.000000e+00> : vector<16xf32>
    %191 = vector.multi_reduction <add>, %190, %cst_75 [0] : vector<16x16xf32> to vector<16xf32>
    %192 = vector.shape_cast %191 : vector<16xf32> to vector<1x16xf32>
    %193 = vector.broadcast %182 : vector<16x1xf32> to vector<16x16xf32>
    %194 = vector.broadcast %187 : vector<1x16xf32> to vector<16x16xf32>
    %195 = arith.mulf %193, %194 : vector<16x16xf32>
    %196 = arith.addf %195, %2 : vector<16x16xf32>
    %cst_76 = arith.constant dense<0xFF800000> : vector<16xf32>
    %197 = vector.multi_reduction <maximumf>, %196, %cst_76 [1] : vector<16x16xf32> to vector<16xf32>
    %198 = vector.shape_cast %197 : vector<16xf32> to vector<16x1xf32>
    %199 = vector.broadcast %198 : vector<16x1xf32> to vector<16x16xf32>
    %200 = arith.subf %196, %199 : vector<16x16xf32>
    %201 = math.exp %200 : vector<16x16xf32>
    %cst_77 = arith.constant dense<0.000000e+00> : vector<16xf32>
    %202 = vector.multi_reduction <add>, %201, %cst_77 [1] : vector<16x16xf32> to vector<16xf32>
    %203 = vector.shape_cast %202 : vector<16xf32> to vector<16x1xf32>
    %204 = tpu.reciprocal %203 {approx = true} : vector<16x1xf32> -> vector<16x1xf32>
    %205 = vector.broadcast %204 : vector<16x1xf32> to vector<16x16xf32>
    %206 = arith.mulf %201, %205 : vector<16x16xf32>
    %207 = vector.broadcast %192 : vector<1x16xf32> to vector<16x16xf32>
    %208 = arith.mulf %206, %207 : vector<16x16xf32>
    %cst_78 = arith.constant dense<0.000000e+00> : vector<16xf32>
    %209 = vector.multi_reduction <add>, %208, %cst_78 [1] : vector<16x16xf32> to vector<16xf32>
    %210 = vector.shape_cast %209 : vector<16xf32> to vector<16x1xf32>
    %c2_79 = arith.constant 2 : index
    %c0_80 = arith.constant 0 : index
    %c0_81 = arith.constant 0 : index
    %211 = vector.load %arg12[%c2_79, %c0_80, %c0_81] : memref<4x1x32xf32, #tpu.memory_space<vmem>>, vector<1x1x32xf32>
    %212 = vector.shape_cast %211 : vector<1x1x32xf32> to vector<1x32xf32>
    %213 = vector.broadcast %210 : vector<16x1xf32> to vector<16x32xf32>
    %214 = vector.broadcast %212 : vector<1x32xf32> to vector<16x32xf32>
    %215 = arith.mulf %213, %214 : vector<16x32xf32>
    %c2_82 = arith.constant 2 : index
    %c0_83 = arith.constant 0 : index
    %c0_84 = arith.constant 0 : index
    %216 = vector.load %arg13[%c2_82, %c0_83, %c0_84] : memref<4x1x32xf32, #tpu.memory_space<vmem>>, vector<1x1x32xf32>
    %217 = vector.shape_cast %216 : vector<1x1x32xf32> to vector<1x32xf32>
    %218 = vector.broadcast %217 : vector<1x32xf32> to vector<16x32xf32>
    %219 = arith.addf %215, %218 : vector<16x32xf32>
    %220 = arith.addf %173, %219 : vector<16x32xf32>
    %c3 = arith.constant 3 : index
    %c0_85 = arith.constant 0 : index
    %c0_86 = arith.constant 0 : index
    %221 = vector.load %arg10[%c3, %c0_85, %c0_86] : memref<4x32x3xbf16, #tpu.memory_space<vmem>>, vector<1x32x3xbf16>
    %222 = vector.shape_cast %221 : vector<1x32x3xbf16> to vector<32x3xbf16>
    %223 = arith.truncf %220 : vector<16x32xf32> to vector<16x32xbf16>
    %cst_87 = arith.constant dense<0.000000e+00> : vector<16x3xf32>
    %224 = tpu.matmul %223, %222, %cst_87 {dimension_numbers = #tpu.dot_dimension_numbers<[1], [0], [0], [1], [0, 0, 1, 1], [], []>} : vector<16x32xbf16>, vector<32x3xbf16>, vector<16x3xf32> -> vector<16x3xf32>
    %c3_88 = arith.constant 3 : index
    %c0_89 = arith.constant 0 : index
    %c0_90 = arith.constant 0 : index
    %225 = vector.load %arg11[%c3_88, %c0_89, %c0_90] : memref<4x1x3xf32, #tpu.memory_space<vmem>>, vector<1x1x3xf32>
    %226 = vector.shape_cast %225 : vector<1x1x3xf32> to vector<1x3xf32>
    %227 = vector.broadcast %226 : vector<1x3xf32> to vector<16x3xf32>
    %228 = arith.addf %224, %227 : vector<16x3xf32>
    %229 = vector.extract_strided_slice %228 {offsets = [0, 0], sizes = [16, 1], strides = [1, 1]} : vector<16x3xf32> to vector<16x1xf32>
    %230 = vector.extract_strided_slice %228 {offsets = [0, 1], sizes = [16, 1], strides = [1, 1]} : vector<16x3xf32> to vector<16x1xf32>
    %231 = vector.broadcast %230 : vector<16x1xf32> to vector<16x16xf32>
    %232 = arith.mulf %231, %3 : vector<16x16xf32>
    %cst_91 = arith.constant dense<0.000000e+00> : vector<16xf32>
    %233 = vector.multi_reduction <add>, %232, %cst_91 [0] : vector<16x16xf32> to vector<16xf32>
    %234 = vector.shape_cast %233 : vector<16xf32> to vector<1x16xf32>
    %235 = vector.extract_strided_slice %228 {offsets = [0, 2], sizes = [16, 1], strides = [1, 1]} : vector<16x3xf32> to vector<16x1xf32>
    %236 = vector.broadcast %235 : vector<16x1xf32> to vector<16x16xf32>
    %237 = arith.mulf %236, %3 : vector<16x16xf32>
    %cst_92 = arith.constant dense<0.000000e+00> : vector<16xf32>
    %238 = vector.multi_reduction <add>, %237, %cst_92 [0] : vector<16x16xf32> to vector<16xf32>
    %239 = vector.shape_cast %238 : vector<16xf32> to vector<1x16xf32>
    %240 = vector.broadcast %229 : vector<16x1xf32> to vector<16x16xf32>
    %241 = vector.broadcast %234 : vector<1x16xf32> to vector<16x16xf32>
    %242 = arith.mulf %240, %241 : vector<16x16xf32>
    %243 = arith.addf %242, %2 : vector<16x16xf32>
    %cst_93 = arith.constant dense<0xFF800000> : vector<16xf32>
    %244 = vector.multi_reduction <maximumf>, %243, %cst_93 [1] : vector<16x16xf32> to vector<16xf32>
    %245 = vector.shape_cast %244 : vector<16xf32> to vector<16x1xf32>
    %246 = vector.broadcast %245 : vector<16x1xf32> to vector<16x16xf32>
    %247 = arith.subf %243, %246 : vector<16x16xf32>
    %248 = math.exp %247 : vector<16x16xf32>
    %cst_94 = arith.constant dense<0.000000e+00> : vector<16xf32>
    %249 = vector.multi_reduction <add>, %248, %cst_94 [1] : vector<16x16xf32> to vector<16xf32>
    %250 = vector.shape_cast %249 : vector<16xf32> to vector<16x1xf32>
    %251 = tpu.reciprocal %250 {approx = true} : vector<16x1xf32> -> vector<16x1xf32>
    %252 = vector.broadcast %251 : vector<16x1xf32> to vector<16x16xf32>
    %253 = arith.mulf %248, %252 : vector<16x16xf32>
    %254 = vector.broadcast %239 : vector<1x16xf32> to vector<16x16xf32>
    %255 = arith.mulf %253, %254 : vector<16x16xf32>
    %cst_95 = arith.constant dense<0.000000e+00> : vector<16xf32>
    %256 = vector.multi_reduction <add>, %255, %cst_95 [1] : vector<16x16xf32> to vector<16xf32>
    %257 = vector.shape_cast %256 : vector<16xf32> to vector<16x1xf32>
    %c3_96 = arith.constant 3 : index
    %c0_97 = arith.constant 0 : index
    %c0_98 = arith.constant 0 : index
    %258 = vector.load %arg12[%c3_96, %c0_97, %c0_98] : memref<4x1x32xf32, #tpu.memory_space<vmem>>, vector<1x1x32xf32>
    %259 = vector.shape_cast %258 : vector<1x1x32xf32> to vector<1x32xf32>
    %260 = vector.broadcast %257 : vector<16x1xf32> to vector<16x32xf32>
    %261 = vector.broadcast %259 : vector<1x32xf32> to vector<16x32xf32>
    %262 = arith.mulf %260, %261 : vector<16x32xf32>
    %c3_99 = arith.constant 3 : index
    %c0_100 = arith.constant 0 : index
    %c0_101 = arith.constant 0 : index
    %263 = vector.load %arg13[%c3_99, %c0_100, %c0_101] : memref<4x1x32xf32, #tpu.memory_space<vmem>>, vector<1x1x32xf32>
    %264 = vector.shape_cast %263 : vector<1x1x32xf32> to vector<1x32xf32>
    %265 = vector.broadcast %264 : vector<1x32xf32> to vector<16x32xf32>
    %266 = arith.addf %262, %265 : vector<16x32xf32>
    %267 = arith.addf %220, %266 : vector<16x32xf32>
    %c0_102 = arith.constant 0 : index
    %c0_103 = arith.constant 0 : index
    %268 = vector.load %arg14[%c0_102, %c0_103] : memref<32x128xbf16, #tpu.memory_space<vmem>>, vector<32x128xbf16>
    %269 = arith.truncf %267 : vector<16x32xf32> to vector<16x32xbf16>
    %cst_104 = arith.constant dense<0.000000e+00> : vector<16x128xf32>
    %270 = tpu.matmul %269, %268, %cst_104 {dimension_numbers = #tpu.dot_dimension_numbers<[1], [0], [0], [1], [0, 0, 1, 1], [], []>} : vector<16x32xbf16>, vector<32x128xbf16>, vector<16x128xf32> -> vector<16x128xf32>
    %c0_105 = arith.constant 0 : index
    %c0_106 = arith.constant 0 : index
    %271 = vector.load %arg15[%c0_105, %c0_106] : memref<1x128xf32, #tpu.memory_space<vmem>>, vector<1x128xf32>
    %272 = vector.broadcast %271 : vector<1x128xf32> to vector<16x128xf32>
    %273 = arith.addf %270, %272 : vector<16x128xf32>
    %cst_107 = arith.constant 5.000000e-01 : f32
    %274 = vector.broadcast %cst_107 : f32 to vector<16x128xf32>
    %275 = arith.mulf %274, %273 : vector<16x128xf32>
    %cst_108 = arith.constant 4.471500e-02 : f32
    %276 = vector.broadcast %cst_108 : f32 to vector<16x128xf32>
    %277 = arith.mulf %276, %273 : vector<16x128xf32>
    %278 = arith.mulf %277, %273 : vector<16x128xf32>
    %279 = arith.mulf %278, %273 : vector<16x128xf32>
    %280 = arith.addf %273, %279 : vector<16x128xf32>
    %cst_109 = arith.constant 0.797884583 : f32
    %281 = vector.broadcast %cst_109 : f32 to vector<16x128xf32>
    %282 = arith.mulf %281, %280 : vector<16x128xf32>
    %283 = math.tanh %282 : vector<16x128xf32>
    %cst_110 = arith.constant 1.000000e+00 : f32
    %284 = vector.broadcast %cst_110 : f32 to vector<16x128xf32>
    %285 = arith.addf %284, %283 : vector<16x128xf32>
    %286 = arith.mulf %275, %285 : vector<16x128xf32>
    %c0_111 = arith.constant 0 : index
    %c0_112 = arith.constant 0 : index
    %287 = vector.load %arg16[%c0_111, %c0_112] : memref<128x32xbf16, #tpu.memory_space<vmem>>, vector<128x32xbf16>
    %288 = arith.truncf %286 : vector<16x128xf32> to vector<16x128xbf16>
    %cst_113 = arith.constant dense<0.000000e+00> : vector<16x32xf32>
    %289 = tpu.matmul %288, %287, %cst_113 {dimension_numbers = #tpu.dot_dimension_numbers<[1], [0], [0], [1], [0, 0, 1, 1], [], []>} : vector<16x128xbf16>, vector<128x32xbf16>, vector<16x32xf32> -> vector<16x32xf32>
    %c0_114 = arith.constant 0 : index
    %c0_115 = arith.constant 0 : index
    %290 = vector.load %arg17[%c0_114, %c0_115] : memref<1x32xf32, #tpu.memory_space<vmem>>, vector<1x32xf32>
    %291 = vector.broadcast %290 : vector<1x32xf32> to vector<16x32xf32>
    %292 = arith.addf %289, %291 : vector<16x32xf32>
    %293 = arith.addf %292, %267 : vector<16x32xf32>
    %c0_116 = arith.constant 0 : index
    %c0_117 = arith.constant 0 : index
    %294 = vector.load %arg18[%c0_116, %c0_117] : memref<1x32xf32, #tpu.memory_space<vmem>>, vector<1x32xf32>
    %c0_118 = arith.constant 0 : index
    %c0_119 = arith.constant 0 : index
    %295 = vector.load %arg19[%c0_118, %c0_119] : memref<1x32xf32, #tpu.memory_space<vmem>>, vector<1x32xf32>
    %cst_120 = arith.constant dense<0.000000e+00> : vector<16xf32>
    %296 = vector.multi_reduction <add>, %293, %cst_120 [1] : vector<16x32xf32> to vector<16xf32>
    %297 = vector.shape_cast %296 : vector<16xf32> to vector<16x1xf32>
    %cst_121 = arith.constant 3.200000e+01 : f32
    %298 = vector.broadcast %cst_121 : f32 to vector<16x1xf32>
    %299 = arith.divf %297, %298 : vector<16x1xf32>
    %300 = vector.broadcast %299 : vector<16x1xf32> to vector<16x32xf32>
    %301 = arith.subf %293, %300 : vector<16x32xf32>
    %302 = arith.mulf %301, %301 : vector<16x32xf32>
    %cst_122 = arith.constant dense<0.000000e+00> : vector<16xf32>
    %303 = vector.multi_reduction <add>, %302, %cst_122 [1] : vector<16x32xf32> to vector<16xf32>
    %304 = vector.shape_cast %303 : vector<16xf32> to vector<16x1xf32>
    %cst_123 = arith.constant 3.200000e+01 : f32
    %305 = vector.broadcast %cst_123 : f32 to vector<16x1xf32>
    %306 = arith.divf %304, %305 : vector<16x1xf32>
    %cst_124 = arith.constant 9.99999996E-13 : f32
    %307 = vector.broadcast %cst_124 : f32 to vector<16x1xf32>
    %308 = arith.addf %306, %307 : vector<16x1xf32>
    %309 = math.rsqrt %308 : vector<16x1xf32>
    %310 = vector.broadcast %309 : vector<16x1xf32> to vector<16x32xf32>
    %311 = arith.mulf %301, %310 : vector<16x32xf32>
    %312 = vector.broadcast %294 : vector<1x32xf32> to vector<16x32xf32>
    %313 = arith.mulf %311, %312 : vector<16x32xf32>
    %314 = vector.broadcast %295 : vector<1x32xf32> to vector<16x32xf32>
    %315 = arith.addf %313, %314 : vector<16x32xf32>
    %c0_125 = arith.constant 0 : index
    %c0_126 = arith.constant 0 : index
    %316 = vector.load %arg20[%c0_125, %c0_126] : memref<16x32xf32, #tpu.memory_space<vmem>>, vector<16x32xf32>
    tpu.vector_store %arg20[%c0_125, %c0_126], %315 {strides = array<i32>} : memref<16x32xf32, #tpu.memory_space<vmem>>, vector<16x32xf32>,
    return
  }
}

</mosaic_0001>

<llo_original>
// kernel: roberta_layer_ada.1
$region0: #{roberta_layer_ada.1}
  #allocation0 [shape = 'u32[]', space=smem, size = 0x4, offset = 0x4, fixed_abs, tag = 'smem constant byte address 0x4 - core index']
  #allocation1 [shape = 'u32[144,128]{1,0:T(1,128)}', space=vmem, size = 0x12000, scoped, tag = 'internal scratch']
  %s0 = inlined_call_operand.vmem [shape: f32[16,32], index: 0, kind: input, shape index: {}]
  %s1 = inlined_call_operand.vmem [shape: f32[16,16], index: 1, kind: input, shape index: {}]
  %s2 = inlined_call_operand.vmem [shape: f32[16,16], index: 2, kind: input, shape index: {}]
  %s3 = inlined_call_operand.vmem [shape: f32[16,16], index: 3, kind: input, shape index: {}]
  %s4 = inlined_call_operand.vmem [shape: bf16[32,96], index: 4, kind: input, shape index: {}]
  %s5 = inlined_call_operand.vmem [shape: f32[1,96], index: 5, kind: input, shape index: {}]
  %s6 = inlined_call_operand.vmem [shape: bf16[32,32], index: 6, kind: input, shape index: {}]
  %s7 = inlined_call_operand.vmem [shape: f32[1,32], index: 7, kind: input, shape index: {}]
  %s8 = inlined_call_operand.vmem [shape: f32[1,32], index: 8, kind: input, shape index: {}]
  %s9 = inlined_call_operand.vmem [shape: f32[1,32], index: 9, kind: input, shape index: {}]
  %s10 = inlined_call_operand.vmem [shape: bf16[4,32,3], index: 10, kind: input, shape index: {}]
  %s11 = inlined_call_operand.vmem [shape: f32[4,1,3], index: 11, kind: input, shape index: {}]
  %s12 = inlined_call_operand.vmem [shape: f32[4,1,32], index: 12, kind: input, shape index: {}]
  %s13 = inlined_call_operand.vmem [shape: f32[4,1,32], index: 13, kind: input, shape index: {}]
  %s14 = inlined_call_operand.vmem [shape: bf16[32,128], index: 14, kind: input, shape index: {}]
  %s15 = inlined_call_operand.vmem [shape: f32[1,128], index: 15, kind: input, shape index: {}]
  %s16 = inlined_call_operand.vmem [shape: bf16[128,32], index: 16, kind: input, shape index: {}]
  %s17 = inlined_call_operand.vmem [shape: f32[1,32], index: 17, kind: input, shape index: {}]
  %s18 = inlined_call_operand.vmem [shape: f32[1,32], index: 18, kind: input, shape index: {}]
  %s19 = inlined_call_operand.vmem [shape: f32[1,32], index: 19, kind: input, shape index: {}]
  %s20 = inlined_call_operand.hbm [shape: f32[16,32], index: 20, kind: output, shape index: {}]
  %s21 = sld [smem:[#allocation0]]
  $region90: #{roberta_layer_ada.1} parent=0
    _
  %s23 = ssub.s32 1, %s21
  %s24 = scalar_select 0, %s23, %s21
  $region1: #{roberta_layer_ada.1} parent=0
    #allocation2 [shape = 'u8[8192]{0}', space=vmem, size = 0x2000, scoped, tag = 'output window, operand 0, single buffered']
    #allocation3 [shape = 's32[1]{0}', space=sflag, size = 0x4, scoped, tag = 'scoped memory for roberta_layer_ada.1']
    %25 = vsyncpa [#allocation3], 0
    // Predicated region
    $region2: #{roberta_layer_ada.1} parent=1 // pred_check
      _
    $region3: #{roberta_layer_ada.1} parent=1 // pred_check_branch
      %27 = sbr.rel (0) target = $region5
    $region4: #{roberta_layer_ada.1} parent=1 // pred_region
      _
    $region5: #{roberta_layer_ada.1} parent=1 // pred_fallthru
      _
    // Predicated region
    $region6: #{roberta_layer_ada.1} parent=1 // pred_check
      _
    $region7: #{roberta_layer_ada.1} parent=1 // pred_check_branch
      %29 = sbr.rel (0) target = $region9
    $region8: #{roberta_layer_ada.1} parent=1 // pred_region
      _
    $region9: #{roberta_layer_ada.1} parent=1 // pred_fallthru
      _
    // Predicated region
    $region10: #{roberta_layer_ada.1} parent=1 // pred_check
      _
    $region11: #{roberta_layer_ada.1} parent=1 // pred_check_branch
      %31 = sbr.rel (0) target = $region13
    $region12: #{roberta_layer_ada.1} parent=1 // pred_region
      _
    $region13: #{roberta_layer_ada.1} parent=1 // pred_fallthru
      _
    // Predicated region
    $region14: #{roberta_layer_ada.1} parent=1 // pred_check
      _
    $region15: #{roberta_layer_ada.1} parent=1 // pred_check_branch
      %33 = sbr.rel (0) target = $region17
    $region16: #{roberta_layer_ada.1} parent=1 // pred_region
      _
    $region17: #{roberta_layer_ada.1} parent=1 // pred_fallthru
      _
    // Predicated region
    $region18: #{roberta_layer_ada.1} parent=1 // pred_check
      _
    $region19: #{roberta_layer_ada.1} parent=1 // pred_check_branch
      %35 = sbr.rel (0) target = $region21
    $region20: #{roberta_layer_ada.1} parent=1 // pred_region
      _
    $region21: #{roberta_layer_ada.1} parent=1 // pred_fallthru
      _
    // Predicated region
    $region22: #{roberta_layer_ada.1} parent=1 // pred_check
      _
    $region23: #{roberta_layer_ada.1} parent=1 // pred_check_branch
      %37 = sbr.rel (0) target = $region25
    $region24: #{roberta_layer_ada.1} parent=1 // pred_region
      _
    $region25: #{roberta_layer_ada.1} parent=1 // pred_fallthru
      _
    // Predicated region
    $region26: #{roberta_layer_ada.1} parent=1 // pred_check
      _
    $region27: #{roberta_layer_ada.1} parent=1 // pred_check_branch
      %39 = sbr.rel (0) target = $region29
    $region28: #{roberta_layer_ada.1} parent=1 // pred_region
      _
    $region29: #{roberta_layer_ada.1} parent=1 // pred_fallthru
      _
    // Predicated region
    $region30: #{roberta_layer_ada.1} parent=1 // pred_check
      _
    $region31: #{roberta_layer_ada.1} parent=1 // pred_check_branch
      %41 = sbr.rel (0) target = $region33
    $region32: #{roberta_layer_ada.1} parent=1 // pred_region
      _
    $region33: #{roberta_layer_ada.1} parent=1 // pred_fallthru
      _
    // Predicated region
    $region34: #{roberta_layer_ada.1} parent=1 // pred_check
      _
    $region35: #{roberta_layer_ada.1} parent=1 // pred_check_branch
      %43 = sbr.rel (0) target = $region37
    $region36: #{roberta_layer_ada.1} parent=1 // pred_region
      _
    $region37: #{roberta_layer_ada.1} parent=1 // pred_fallthru
      _
    // Predicated region
    $region38: #{roberta_layer_ada.1} parent=1 // pred_check
      _
    $region39: #{roberta_layer_ada.1} parent=1 // pred_check_branch
      %45 = sbr.rel (0) target = $region41
    $region40: #{roberta_layer_ada.1} parent=1 // pred_region
      _
    $region41: #{roberta_layer_ada.1} parent=1 // pred_fallthru
      _
    // Predicated region
    $region42: #{roberta_layer_ada.1} parent=1 // pred_check
      _
    $region43: #{roberta_layer_ada.1} parent=1 // pred_check_branch
      %47 = sbr.rel (0) target = $region45
    $region44: #{roberta_layer_ada.1} parent=1 // pred_region
      _
    $region45: #{roberta_layer_ada.1} parent=1 // pred_fallthru
      _
    // Predicated region
    $region46: #{roberta_layer_ada.1} parent=1 // pred_check
      _
    $region47: #{roberta_layer_ada.1} parent=1 // pred_check_branch
      %49 = sbr.rel (0) target = $region49
    $region48: #{roberta_layer_ada.1} parent=1 // pred_region
      _
    $region49: #{roberta_layer_ada.1} parent=1 // pred_fallthru
      _
    // Predicated region
    $region50: #{roberta_layer_ada.1} parent=1 // pred_check
      _
    $region51: #{roberta_layer_ada.1} parent=1 // pred_check_branch
      %51 = sbr.rel (0) target = $region53
    $region52: #{roberta_layer_ada.1} parent=1 // pred_region
      _
    $region53: #{roberta_layer_ada.1} parent=1 // pred_fallthru
      _
    // Predicated region
    $region54: #{roberta_layer_ada.1} parent=1 // pred_check
      _
    $region55: #{roberta_layer_ada.1} parent=1 // pred_check_branch
      %53 = sbr.rel (0) target = $region57
    $region56: #{roberta_layer_ada.1} parent=1 // pred_region
      _
    $region57: #{roberta_layer_ada.1} parent=1 // pred_fallthru
      _
    // Predicated region
    $region58: #{roberta_layer_ada.1} parent=1 // pred_check
      _
    $region59: #{roberta_layer_ada.1} parent=1 // pred_check_branch
      %55 = sbr.rel (0) target = $region61
    $region60: #{roberta_layer_ada.1} parent=1 // pred_region
      _
    $region61: #{roberta_layer_ada.1} parent=1 // pred_fallthru
      _
    // Predicated region
    $region62: #{roberta_layer_ada.1} parent=1 // pred_check
      _
    $region63: #{roberta_layer_ada.1} parent=1 // pred_check_branch
      %57 = sbr.rel (0) target = $region65
    $region64: #{roberta_layer_ada.1} parent=1 // pred_region
      _
    $region65: #{roberta_layer_ada.1} parent=1 // pred_fallthru
      _
    // Predicated region
    $region66: #{roberta_layer_ada.1} parent=1 // pred_check
      _
    $region67: #{roberta_layer_ada.1} parent=1 // pred_check_branch
      %59 = sbr.rel (0) target = $region69
    $region68: #{roberta_layer_ada.1} parent=1 // pred_region
      _
    $region69: #{roberta_layer_ada.1} parent=1 // pred_fallthru
      _
    // Predicated region
    $region70: #{roberta_layer_ada.1} parent=1 // pred_check
      _
    $region71: #{roberta_layer_ada.1} parent=1 // pred_check_branch
      %61 = sbr.rel (0) target = $region73
    $region72: #{roberta_layer_ada.1} parent=1 // pred_region
      _
    $region73: #{roberta_layer_ada.1} parent=1 // pred_fallthru
      _
    // Predicated region
    $region74: #{roberta_layer_ada.1} parent=1 // pred_check
      _
    $region75: #{roberta_layer_ada.1} parent=1 // pred_check_branch
      %63 = sbr.rel (0) target = $region77
    $region76: #{roberta_layer_ada.1} parent=1 // pred_region
      _
    $region77: #{roberta_layer_ada.1} parent=1 // pred_fallthru
      _
    // Predicated region
    $region78: #{roberta_layer_ada.1} parent=1 // pred_check
      _
    $region79: #{roberta_layer_ada.1} parent=1 // pred_check_branch
      %65 = sbr.rel (0) target = $region81
    $region80: #{roberta_layer_ada.1} parent=1 // pred_region
      _
    $region81: #{roberta_layer_ada.1} parent=1 // pred_fallthru
      _
    %v67 = vld [vmem:[%s0] sm:$0xff]
    %v68 = vld [vmem:[%s0 + $0x8] sm:$0xff]
    %v69 = vld [vmem:[%s1] sm:$0xff]
    %v70 = vld [vmem:[%s1 + $0x8] sm:$0xff]
    %v71 = vld [vmem:[%s2] sm:$0xff]
    %v72 = vld [vmem:[%s2 + $0x8] sm:$0xff]
    %v73 = vld [vmem:[%s3] sm:$0xff]
    %v74 = vld [vmem:[%s3 + $0x8] sm:$0xff]
    %v75 = vld [vmem:[%s4] sm:$0xf]
    %v76 = vld [vmem:[%s4 + $0x4] sm:$0xf]
    %v77 = vld [vmem:[%s4 + $0x8] sm:$0xf]
    %v78 = vld [vmem:[%s4 + $0xc] sm:$0xf]
    %v79 = vpack.c.bf16 %v68, %v67
    %v80 = vld [vmem:[%s5] sm:$0x1]
    %v82 = vlaneseq
    %v83 = vshrl.u32 %v82, 7
    %v84 = vsub.s32 0, %v83
    %v85 = vrot.slane %v80, %v84
    %v91 = vunpack.c.l.b16 %v75
    %v92 = vunpack.c.l.b16 %v76
    %v93 = vunpack.c.l.b16 %v77
    %v94 = vunpack.c.l.b16 %v78
    %v95 = vpack.c.b16 %v92, %v91
    %v96 = vpack.c.b16 %v94, %v93
    %vm99 = vcmask 261120
    %v101 = vsel %vm99, %v79, 0
    %103 = vmatprep.subr.bf16.mxu0 0
    %104 = vmatpush1.bf16.msra.mxu0 0
    %105 = vmatprep.subr.bf16.mxu0 0
    %106 = vmatpush1.bf16.msra.mxu0 0
    %107 = vmatprep.subr.bf16.mxu0 0
    %108 = vmatpush1.bf16.msra.mxu0 0
    %109 = vmatprep.subr.bf16.mxu0 0
    %110 = vmatpush1.bf16.msra.mxu0 0
    %111 = vmatprep.subr.bf16.mxu0 0
    %112 = vmatpush1.bf16.msra.mxu0 0
    %113 = vmatprep.subr.bf16.mxu0 0
    %114 = vmatpush1.bf16.msra.mxu0 0
    %115 = vmatprep.subr.bf16.mxu0 0
    %116 = vmatpush1.bf16.msra.mxu0 %v96
    %117 = vmatprep.subr.bf16.mxu0 0
    %118 = vmatpush1.bf16.msra.mxu0 %v95
    %119 = vmatprep.subr.bf16.mxu0 0
    %120 = vmatpush2.bf16.msra.mxu0 0
    %121 = vmatprep.subr.bf16.mxu0 0
    %122 = vmatpush2.bf16.msra.mxu0 0
    %123 = vmatprep.subr.bf16.mxu0 0
    %124 = vmatpush2.bf16.msra.mxu0 0
    %125 = vmatprep.subr.bf16.mxu0 0
    %126 = vmatpush2.bf16.msra.mxu0 0
    %127 = vmatprep.subr.bf16.mxu0 0
    %128 = vmatpush2.bf16.msra.mxu0 0
    %129 = vmatprep.subr.bf16.mxu0 0
    %130 = vmatpush2.bf16.msra.mxu0 0
    %131 = vmatprep.subr.bf16.mxu0 0
    %132 = vmatpush2.bf16.msra.mxu0 0
    %133 = vmatprep.subr.bf16.mxu0 0
    %134 = vmatpush2.bf16.msra.mxu0 0
    %135 = vmatprep.mubr.bf16.mxu0 0
    %136 = vmatmul.mubr.bf16.gmra.mxu0 %v101
    %v137 = vpop.f32.mrf.mxu0
    %v138 = vadd.f32 %v85, %v137
    %v139 = vpop.f32.mrf.mxu0
    %v140 = vpop.f32.mrf.mxu0
    %v141 = vadd.f32 %v85, %v140
    %v142 = vpop.f32.mrf.mxu0
    %143 = vdwg.mxu0
    %v144 = vpack.c.bf16 %v141, %v138
    %146 = vrot.lane.b32.xlu0 %v144, 96
    %v147 = vpop.permute.xlu0 %146
    %vm148 = vcmask 130048
    %v150 = vsel %vm148, %v144, 0
    %v153 = vsel %vm148, %v147, 0
    %155 = vmatprep.subr.bf16.mxu0 0
    %156 = vmatpush1.bf16.xpose.msra.mxu0 0
    %157 = vmatprep.subr.bf16.mxu0 0
    %158 = vmatpush1.bf16.xpose.msra.mxu0 0
    %159 = vmatprep.subr.bf16.mxu0 0
    %160 = vmatpush1.bf16.xpose.msra.mxu0 0
    %161 = vmatprep.subr.bf16.mxu0 0
    %162 = vmatpush1.bf16.xpose.msra.mxu0 0
    %163 = vmatprep.subr.bf16.mxu0 0
    %164 = vmatpush1.bf16.xpose.msra.mxu0 0
    %165 = vmatprep.subr.bf16.mxu0 0
    %166 = vmatpush1.bf16.xpose.msra.mxu0 0
    %167 = vmatprep.subr.bf16.mxu0 0
    %168 = vmatpush1.bf16.xpose.msra.mxu0 0
    %169 = vmatprep.subr.bf16.mxu0 0
    %170 = vmatpush1.bf16.xpose.msra.mxu0 %v153
    %171 = vmatprep.subr.bf16.mxu0 0
    %172 = vmatpush2.bf16.xpose.msra.mxu0 0
    %173 = vmatprep.subr.bf16.mxu0 0
    %174 = vmatpush2.bf16.xpose.msra.mxu0 0
    %175 = vmatprep.subr.bf16.mxu0 0
    %176 = vmatpush2.bf16.xpose.msra.mxu0 0
    %177 = vmatprep.subr.bf16.mxu0 0
    %178 = vmatpush2.bf16.xpose.msra.mxu0 0
    %179 = vmatprep.subr.bf16.mxu0 0
    %180 = vmatpush2.bf16.xpose.msra.mxu0 0
    %181 = vmatprep.subr.bf16.mxu0 0
    %182 = vmatpush2.bf16.xpose.msra.mxu0 0
    %183 = vmatprep.subr.bf16.mxu0 0
    %184 = vmatpush2.bf16.xpose.msra.mxu0 0
    %185 = vmatprep.subr.bf16.mxu0 0
    %186 = vmatpush2.bf16.xpose.msra.mxu0 0
    %187 = vmatprep.mubr.bf16.mxu0 0
    %188 = vmatmul.mubr.bf16.gmra.mxu0 %v150
    %v189 = vpop.f32.mrf.mxu0
    %v190 = vadd.f32 %v69, %v189
    %v191 = vpop.f32.mrf.mxu0
    %v192 = vpop.f32.mrf.mxu0
    %v193 = vadd.f32 %v70, %v192
    %v194 = vpop.f32.mrf.mxu0
    %195 = vdwg.mxu0
    %v196 = vsel %vm148, %v190, -inf
    %197 = vmax.xlane.f32.xlu0 %v196
    %v198 = vpop.xlane.xlu0 %197
    %v199 = vsel %vm148, %v193, -inf
    %200 = vmax.xlane.f32.xlu0 %v199
    %v201 = vpop.xlane.xlu0 %200
    %v202 = vsub.f32 %v190, %v198
    %v203 = vsub.f32 %v193, %v201
    %v204 = vmul.f32 %v202, 1.442695
    %v205 = vpow.pop %v204
    %v206 = vmul.f32 %v203, 1.442695
    %v207 = vpow.pop %v206
    %v208 = vsel %vm148, %v205, 0.0
    %209 = vadd.xlane.f32.xlu0 %v208
    %v210 = vpop.xlane.xlu0 %209
    %v211 = vsel %vm148, %v207, 0.0
    %212 = vadd.xlane.f32.xlu0 %v211
    %v213 = vpop.xlane.xlu0 %212
    %v214 = vrcp.pop %v210
    %v215 = vrcp.pop %v213
    %v216 = vmul.f32 %v205, %v214
    %v217 = vmul.f32 %v207, %v215
    %v218 = vpack.c.bf16 %v217, %v216
    %219 = vrot.lane.b32.xlu0 %v144, 64
    %v220 = vpop.permute.xlu0 %219
    %v223 = vsel %vm148, %v218, 0
    %225 = vmatprep.subr.bf16.mxu0 0
    %226 = vmatpush1.bf16.msra.mxu0 0
    %227 = vmatprep.subr.bf16.mxu0 0
    %228 = vmatpush1.bf16.msra.mxu0 0
    %229 = vmatprep.subr.bf16.mxu0 0
    %230 = vmatpush1.bf16.msra.mxu0 0
    %231 = vmatprep.subr.bf16.mxu0 0
    %232 = vmatpush1.bf16.msra.mxu0 0
    %233 = vmatprep.subr.bf16.mxu0 0
    %234 = vmatpush1.bf16.msra.mxu0 0
    %235 = vmatprep.subr.bf16.mxu0 0
    %236 = vmatpush1.bf16.msra.mxu0 0
    %237 = vmatprep.subr.bf16.mxu0 0
    %238 = vmatpush1.bf16.msra.mxu0 0
    %239 = vmatprep.subr.bf16.mxu0 0
    %240 = vmatpush1.bf16.msra.mxu0 %v220
    %241 = vmatprep.subr.bf16.mxu0 0
    %242 = vmatpush2.bf16.msra.mxu0 0
    %243 = vmatprep.subr.bf16.mxu0 0
    %244 = vmatpush2.bf16.msra.mxu0 0
    %245 = vmatprep.subr.bf16.mxu0 0
    %246 = vmatpush2.bf16.msra.mxu0 0
    %247 = vmatprep.subr.bf16.mxu0 0
    %248 = vmatpush2.bf16.msra.mxu0 0
    %249 = vmatprep.subr.bf16.mxu0 0
    %250 = vmatpush2.bf16.msra.mxu0 0
    %251 = vmatprep.subr.bf16.mxu0 0
    %252 = vmatpush2.bf16.msra.mxu0 0
    %253 = vmatprep.subr.bf16.mxu0 0
    %254 = vmatpush2.bf16.msra.mxu0 0
    %255 = vmatprep.subr.bf16.mxu0 0
    %256 = vmatpush2.bf16.msra.mxu0 0
    %257 = vmatprep.mubr.bf16.mxu0 0
    %258 = vmatmul.mubr.bf16.gmra.mxu0 %v223
    %v259 = vpop.f32.mrf.mxu0
    %v260 = vadd.f32 0.0, %v259
    %v261 = vpop.f32.mrf.mxu0
    %v262 = vpop.f32.mrf.mxu0
    %v263 = vadd.f32 0.0, %v262
    %v264 = vpop.f32.mrf.mxu0
    %265 = vdwg.mxu0
    %266 = vrot.lane.b32.xlu0 %v144, 112
    %v267 = vpop.permute.xlu0 %266
    %268 = vrot.lane.b32.xlu0 %v144, 80
    %v269 = vpop.permute.xlu0 %268
    %v271 = vsel %vm148, %v267, 0
    %v274 = vsel %vm148, %v269, 0
    %276 = vmatprep.subr.bf16.mxu0 0
    %277 = vmatpush1.bf16.xpose.msra.mxu0 0
    %278 = vmatprep.subr.bf16.mxu0 0
    %279 = vmatpush1.bf16.xpose.msra.mxu0 0
    %280 = vmatprep.subr.bf16.mxu0 0
    %281 = vmatpush1.bf16.xpose.msra.mxu0 0
    %282 = vmatprep.subr.bf16.mxu0 0
    %283 = vmatpush1.bf16.xpose.msra.mxu0 0
    %284 = vmatprep.subr.bf16.mxu0 0
    %285 = vmatpush1.bf16.xpose.msra.mxu0 0
    %286 = vmatprep.subr.bf16.mxu0 0
    %287 = vmatpush1.bf16.xpose.msra.mxu0 0
    %288 = vmatprep.subr.bf16.mxu0 0
    %289 = vmatpush1.bf16.xpose.msra.mxu0 0
    %290 = vmatprep.subr.bf16.mxu0 0
    %291 = vmatpush1.bf16.xpose.msra.mxu0 %v274
    %292 = vmatprep.subr.bf16.mxu0 0
    %293 = vmatpush2.bf16.xpose.msra.mxu0 0
    %294 = vmatprep.subr.bf16.mxu0 0
    %295 = vmatpush2.bf16.xpose.msra.mxu0 0
    %296 = vmatprep.subr.bf16.mxu0 0
    %297 = vmatpush2.bf16.xpose.msra.mxu0 0
    %298 = vmatprep.subr.bf16.mxu0 0
    %299 = vmatpush2.bf16.xpose.msra.mxu0 0
    %300 = vmatprep.subr.bf16.mxu0 0
    %301 = vmatpush2.bf16.xpose.msra.mxu0 0
    %302 = vmatprep.subr.bf16.mxu0 0
    %303 = vmatpush2.bf16.xpose.msra.mxu0 0
    %304 = vmatprep.subr.bf16.mxu0 0
    %305 = vmatpush2.bf16.xpose.msra.mxu0 0
    %306 = vmatprep.subr.bf16.mxu0 0
    %307 = vmatpush2.bf16.xpose.msra.mxu0 0
    %308 = vmatprep.mubr.bf16.mxu0 0
    %309 = vmatmul.mubr.bf16.gmra.mxu0 %v271
    %v310 = vpop.f32.mrf.mxu0
    %v311 = vadd.f32 %v69, %v310
    %v312 = vpop.f32.mrf.mxu0
    %v313 = vpop.f32.mrf.mxu0
    %v314 = vadd.f32 %v70, %v313
    %v315 = vpop.f32.mrf.mxu0
    %316 = vdwg.mxu0
    %v317 = vsel %vm148, %v311, -inf
    %318 = vmax.xlane.f32.xlu0 %v317
    %v319 = vpop.xlane.xlu0 %318
    %v320 = vsel %vm148, %v314, -inf
    %321 = vmax.xlane.f32.xlu0 %v320
    %v322 = vpop.xlane.xlu0 %321
    %v323 = vsub.f32 %v311, %v319
    %v324 = vsub.f32 %v314, %v322
    %v325 = vmul.f32 %v323, 1.442695
    %v326 = vpow.pop %v325
    %v327 = vmul.f32 %v324, 1.442695
    %v328 = vpow.pop %v327
    %v329 = vsel %vm148, %v326, 0.0
    %330 = vadd.xlane.f32.xlu0 %v329
    %v331 = vpop.xlane.xlu0 %330
    %v332 = vsel %vm148, %v328, 0.0
    %333 = vadd.xlane.f32.xlu0 %v332
    %v334 = vpop.xlane.xlu0 %333
    %v335 = vrcp.pop %v331
    %v336 = vrcp.pop %v334
    %v337 = vmul.f32 %v326, %v335
    %v338 = vmul.f32 %v328, %v336
    %v339 = vpack.c.bf16 %v338, %v337
    %340 = vrot.lane.b32.xlu0 %v144, 48
    %v341 = vpop.permute.xlu0 %340
    %v344 = vsel %vm148, %v339, 0
    %346 = vmatprep.subr.bf16.mxu0 0
    %347 = vmatpush1.bf16.msra.mxu0 0
    %348 = vmatprep.subr.bf16.mxu0 0
    %349 = vmatpush1.bf16.msra.mxu0 0
    %350 = vmatprep.subr.bf16.mxu0 0
    %351 = vmatpush1.bf16.msra.mxu0 0
    %352 = vmatprep.subr.bf16.mxu0 0
    %353 = vmatpush1.bf16.msra.mxu0 0
    %354 = vmatprep.subr.bf16.mxu0 0
    %355 = vmatpush1.bf16.msra.mxu0 0
    %356 = vmatprep.subr.bf16.mxu0 0
    %357 = vmatpush1.bf16.msra.mxu0 0
    %358 = vmatprep.subr.bf16.mxu0 0
    %359 = vmatpush1.bf16.msra.mxu0 0
    %360 = vmatprep.subr.bf16.mxu0 0
    %361 = vmatpush1.bf16.msra.mxu0 %v341
    %362 = vmatprep.subr.bf16.mxu0 0
    %363 = vmatpush2.bf16.msra.mxu0 0
    %364 = vmatprep.subr.bf16.mxu0 0
    %365 = vmatpush2.bf16.msra.mxu0 0
    %366 = vmatprep.subr.bf16.mxu0 0
    %367 = vmatpush2.bf16.msra.mxu0 0
    %368 = vmatprep.subr.bf16.mxu0 0
    %369 = vmatpush2.bf16.msra.mxu0 0
    %370 = vmatprep.subr.bf16.mxu0 0
    %371 = vmatpush2.bf16.msra.mxu0 0
    %372 = vmatprep.subr.bf16.mxu0 0
    %373 = vmatpush2.bf16.msra.mxu0 0
    %374 = vmatprep.subr.bf16.mxu0 0
    %375 = vmatpush2.bf16.msra.mxu0 0
    %376 = vmatprep.subr.bf16.mxu0 0
    %377 = vmatpush2.bf16.msra.mxu0 0
    %378 = vmatprep.mubr.bf16.mxu0 0
    %379 = vmatmul.mubr.bf16.gmra.mxu0 %v344
    %v380 = vpop.f32.mrf.mxu0
    %v381 = vadd.f32 0.0, %v380
    %v382 = vpop.f32.mrf.mxu0
    %v383 = vpop.f32.mrf.mxu0
    %v384 = vadd.f32 0.0, %v383
    %v385 = vpop.f32.mrf.mxu0
    %386 = vdwg.mxu0
    %389 = vrot.lane.b32.xlu0 %v381, 16
    %v390 = vpop.permute.xlu0 %389
    %391 = vrot.lane.b32.xlu0 %v384, 16
    %v392 = vpop.permute.xlu0 %391
    %v395 = vsel %vm148, %v260, %v390
    %v396 = vsel %vm148, %v263, %v392
    %v397 = vld [vmem:[%s6] sm:$0xf]
    %v398 = vld [vmem:[%s6 + $0x4] sm:$0xf]
    %v399 = vld [vmem:[%s6 + $0x8] sm:$0xf]
    %v400 = vld [vmem:[%s6 + $0xc] sm:$0xf]
    %v401 = vpack.c.bf16 %v396, %v395
    %v402 = vld [vmem:[%s7] sm:$0x1]
    %v404 = vlaneseq
    %v405 = vshrl.u32 %v404, 7
    %v406 = vsub.s32 0, %v405
    %v407 = vrot.slane %v402, %v406
    %v413 = vunpack.c.l.b16 %v397
    %v414 = vunpack.c.l.b16 %v398
    %v415 = vunpack.c.l.b16 %v399
    %v416 = vunpack.c.l.b16 %v400
    %v417 = vpack.c.b16 %v414, %v413
    %v418 = vpack.c.b16 %v416, %v415
    %v422 = vsel %vm99, %v401, 0
    %424 = vmatprep.subr.bf16.mxu0 0
    %425 = vmatpush1.bf16.msra.mxu0 0
    %426 = vmatprep.subr.bf16.mxu0 0
    %427 = vmatpush1.bf16.msra.mxu0 0
    %428 = vmatprep.subr.bf16.mxu0 0
    %429 = vmatpush1.bf16.msra.mxu0 0
    %430 = vmatprep.subr.bf16.mxu0 0
    %431 = vmatpush1.bf16.msra.mxu0 0
    %432 = vmatprep.subr.bf16.mxu0 0
    %433 = vmatpush1.bf16.msra.mxu0 0
    %434 = vmatprep.subr.bf16.mxu0 0
    %435 = vmatpush1.bf16.msra.mxu0 0
    %436 = vmatprep.subr.bf16.mxu0 0
    %437 = vmatpush1.bf16.msra.mxu0 %v418
    %438 = vmatprep.subr.bf16.mxu0 0
    %439 = vmatpush1.bf16.msra.mxu0 %v417
    %440 = vmatprep.subr.bf16.mxu0 0
    %441 = vmatpush2.bf16.msra.mxu0 0
    %442 = vmatprep.subr.bf16.mxu0 0
    %443 = vmatpush2.bf16.msra.mxu0 0
    %444 = vmatprep.subr.bf16.mxu0 0
    %445 = vmatpush2.bf16.msra.mxu0 0
    %446 = vmatprep.subr.bf16.mxu0 0
    %447 = vmatpush2.bf16.msra.mxu0 0
    %448 = vmatprep.subr.bf16.mxu0 0
    %449 = vmatpush2.bf16.msra.mxu0 0
    %450 = vmatprep.subr.bf16.mxu0 0
    %451 = vmatpush2.bf16.msra.mxu0 0
    %452 = vmatprep.subr.bf16.mxu0 0
    %453 = vmatpush2.bf16.msra.mxu0 0
    %454 = vmatprep.subr.bf16.mxu0 0
    %455 = vmatpush2.bf16.msra.mxu0 0
    %456 = vmatprep.mubr.bf16.mxu0 0
    %457 = vmatmul.mubr.bf16.gmra.mxu0 %v422
    %v458 = vpop.f32.mrf.mxu0
    %v459 = vadd.f32 %v407, %v458
    %v460 = vpop.f32.mrf.mxu0
    %v461 = vpop.f32.mrf.mxu0
    %v462 = vadd.f32 %v407, %v461
    %v463 = vpop.f32.mrf.mxu0
    %464 = vdwg.mxu0
    %v465 = vadd.f32 %v459, %v67
    %v466 = vadd.f32 %v462, %v68
    %v467 = vld [vmem:[%s8] sm:$0x1]
    %v468 = vld [vmem:[%s9] sm:$0x1]
    %v469 = vsel %vm99, %v465, 0.0
    %470 = vadd.xlane.f32.xlu0 %v469
    %v471 = vpop.xlane.xlu0 %470
    %v472 = vsel %vm99, %v466, 0.0
    %473 = vadd.xlane.f32.xlu0 %v472
    %v474 = vpop.xlane.xlu0 %473
    %v475 = vrcp.pop 32.0
    %v476 = vmul.f32 %v471, %v475
    %v477 = vmul.f32 %v474, %v475
    %v478 = vsub.f32 %v465, %v476
    %v479 = vsub.f32 %v466, %v477
    %v480 = vmul.f32 %v478, %v478
    %v481 = vmul.f32 %v479, %v479
    %v482 = vsel %vm99, %v480, 0.0
    %483 = vadd.xlane.f32.xlu0 %v482
    %v484 = vpop.xlane.xlu0 %483
    %v485 = vsel %vm99, %v481, 0.0
    %486 = vadd.xlane.f32.xlu0 %v485
    %v487 = vpop.xlane.xlu0 %486
    %v488 = vmul.f32 %v484, %v475
    %v489 = vmul.f32 %v487, %v475
    %v490 = vadd.f32 %v488, 1e-12
    %v491 = vadd.f32 %v489, 1e-12
    %v492 = vrsqrt.pop %v490
    %v493 = vrsqrt.pop %v491
    %v494 = vmul.f32 %v478, %v492
    %v495 = vmul.f32 %v479, %v493
    %v497 = vlaneseq
    %v498 = vshrl.u32 %v497, 7
    %v499 = vsub.s32 0, %v498
    %v500 = vrot.slane %v467, %v499
    %v502 = vmul.f32 %v494, %v500
    %v503 = vmul.f32 %v495, %v500
    %v505 = vlaneseq
    %v506 = vshrl.u32 %v505, 7
    %v507 = vsub.s32 0, %v506
    %v508 = vrot.slane %v468, %v507
    %v510 = vadd.f32 %v502, %v508
    %v511 = vadd.f32 %v503, %v508
    %v512 = vld [vmem:[%s10] sm:$0xf]
    %v513 = vld [vmem:[%s10 + $0x4] sm:$0xf]
    %v514 = vld [vmem:[%s10 + $0x8] sm:$0xf]
    %v515 = vld [vmem:[%s10 + $0xc] sm:$0xf]
    %v516 = vpack.c.bf16 %v511, %v510
    %v517 = vld [vmem:[%s11] sm:$0x1]
    %v519 = vlaneseq
    %v520 = vshrl.u32 %v519, 7
    %v521 = vsub.s32 0, %v520
    %v522 = vrot.slane %v517, %v521
    %v528 = vunpack.c.l.b16 %v512
    %v529 = vunpack.c.l.b16 %v513
    %v530 = vunpack.c.l.b16 %v514
    %v531 = vunpack.c.l.b16 %v515
    %v532 = vpack.c.b16 %v529, %v528
    %v533 = vpack.c.b16 %v531, %v530
    %v537 = vsel %vm99, %v516, 0
    %539 = vmatprep.subr.bf16.mxu0 0
    %540 = vmatpush1.bf16.msra.mxu0 0
    %541 = vmatprep.subr.bf16.mxu0 0
    %542 = vmatpush1.bf16.msra.mxu0 0
    %543 = vmatprep.subr.bf16.mxu0 0
    %544 = vmatpush1.bf16.msra.mxu0 0
    %545 = vmatprep.subr.bf16.mxu0 0
    %546 = vmatpush1.bf16.msra.mxu0 0
    %547 = vmatprep.subr.bf16.mxu0 0
    %548 = vmatpush1.bf16.msra.mxu0 0
    %549 = vmatprep.subr.bf16.mxu0 0
    %550 = vmatpush1.bf16.msra.mxu0 0
    %551 = vmatprep.subr.bf16.mxu0 0
    %552 = vmatpush1.bf16.msra.mxu0 %v533
    %553 = vmatprep.subr.bf16.mxu0 0
    %554 = vmatpush1.bf16.msra.mxu0 %v532
    %555 = vmatprep.subr.bf16.mxu0 0
    %556 = vmatpush2.bf16.msra.mxu0 0
    %557 = vmatprep.subr.bf16.mxu0 0
    %558 = vmatpush2.bf16.msra.mxu0 0
    %559 = vmatprep.subr.bf16.mxu0 0
    %560 = vmatpush2.bf16.msra.mxu0 0
    %561 = vmatprep.subr.bf16.mxu0 0
    %562 = vmatpush2.bf16.msra.mxu0 0
    %563 = vmatprep.subr.bf16.mxu0 0
    %564 = vmatpush2.bf16.msra.mxu0 0
    %565 = vmatprep.subr.bf16.mxu0 0
    %566 = vmatpush2.bf16.msra.mxu0 0
    %567 = vmatprep.subr.bf16.mxu0 0
    %568 = vmatpush2.bf16.msra.mxu0 0
    %569 = vmatprep.subr.bf16.mxu0 0
    %570 = vmatpush2.bf16.msra.mxu0 0
    %571 = vmatprep.mubr.bf16.mxu0 0
    %572 = vmatmul.mubr.bf16.gmra.mxu0 %v537
    %v573 = vpop.f32.mrf.mxu0
    %v574 = vadd.f32 %v522, %v573
    %v575 = vpop.f32.mrf.mxu0
    %v576 = vpop.f32.mrf.mxu0
    %v577 = vadd.f32 %v522, %v576
    %v578 = vpop.f32.mrf.mxu0
    %579 = vdwg.mxu0
    %581 = vset.pattern.permute.xlu0 1
    %582 = vperm.xlu0 %581, %v574
    %v583 = vpop.permute.xlu0 %582
    %586 = vset.pattern.permute.xlu0 1
    %587 = vperm.xlu0 %586, %v577
    %v588 = vpop.permute.xlu0 %587
    %v590 = vmul.f32 %v583, %v73
    %v591 = vmul.f32 %v588, %v74
    %v592 = vsel %vm148, %v590, 0.0
    %v593 = vsel %vm148, %v591, 0.0
    %v594 = vadd.f32 %v592, %v593
    %v595 = vrot.slane %v594, 4
    %v596 = vadd.f32 %v594, %v595
    %v597 = vrot.slane %v596, 2
    %v598 = vadd.f32 %v596, %v597
    %v599 = vrot.slane %v598, 1
    %v600 = vadd.f32 %v598, %v599
    %601 = vset.pattern.permute.xlu0 2
    %602 = vperm.xlu0 %601, %v574
    %v603 = vpop.permute.xlu0 %602
    %605 = vset.pattern.permute.xlu0 2
    %606 = vperm.xlu0 %605, %v577
    %v607 = vpop.permute.xlu0 %606
    %v609 = vmul.f32 %v603, %v73
    %v610 = vmul.f32 %v607, %v74
    %v611 = vsel %vm148, %v609, 0.0
    %v612 = vsel %vm148, %v610, 0.0
    %v613 = vadd.f32 %v611, %v612
    %v614 = vrot.slane %v613, 4
    %v615 = vadd.f32 %v613, %v614
    %v616 = vrot.slane %v615, 2
    %v617 = vadd.f32 %v615, %v616
    %v618 = vrot.slane %v617, 1
    %v619 = vadd.f32 %v617, %v618
    %620 = vset.pattern.permute.xlu0 0
    %621 = vperm.xlu0 %620, %v574
    %v622 = vpop.permute.xlu0 %621
    %624 = vset.pattern.permute.xlu0 0
    %625 = vperm.xlu0 %624, %v577
    %v626 = vpop.permute.xlu0 %625
    %v628 = vmul.f32 %v622, %v600
    %v629 = vmul.f32 %v626, %v600
    %v630 = vadd.f32 %v628, %v71
    %v631 = vadd.f32 %v629, %v72
    %v632 = vsel %vm148, %v630, -inf
    %633 = vmax.xlane.f32.xlu0 %v632
    %v634 = vpop.xlane.xlu0 %633
    %v635 = vsel %vm148, %v631, -inf
    %636 = vmax.xlane.f32.xlu0 %v635
    %v637 = vpop.xlane.xlu0 %636
    %v638 = vsub.f32 %v630, %v634
    %v639 = vsub.f32 %v631, %v637
    %v640 = vmul.f32 %v638, 1.442695
    %v641 = vpow.pop %v640
    %v642 = vmul.f32 %v639, 1.442695
    %v643 = vpow.pop %v642
    %v644 = vsel %vm148, %v641, 0.0
    %645 = vadd.xlane.f32.xlu0 %v644
    %v646 = vpop.xlane.xlu0 %645
    %v647 = vsel %vm148, %v643, 0.0
    %648 = vadd.xlane.f32.xlu0 %v647
    %v649 = vpop.xlane.xlu0 %648
    %v650 = vrcp.pop %v646
    %v651 = vrcp.pop %v649
    %v652 = vmul.f32 %v641, %v650
    %v653 = vmul.f32 %v643, %v651
    %v654 = vmul.f32 %v652, %v619
    %v655 = vmul.f32 %v653, %v619
    %v656 = vsel %vm148, %v654, 0.0
    %657 = vadd.xlane.f32.xlu0 %v656
    %v658 = vpop.xlane.xlu0 %657
    %v659 = vsel %vm148, %v655, 0.0
    %660 = vadd.xlane.f32.xlu0 %v659
    %v661 = vpop.xlane.xlu0 %660
    %v662 = vld [vmem:[%s12] sm:$0x1]
    %v664 = vlaneseq
    %v665 = vshrl.u32 %v664, 7
    %v666 = vsub.s32 0, %v665
    %v667 = vrot.slane %v662, %v666
    %v669 = vmul.f32 %v658, %v667
    %v670 = vmul.f32 %v661, %v667
    %v671 = vld [vmem:[%s13] sm:$0x1]
    %v673 = vlaneseq
    %v674 = vshrl.u32 %v673, 7
    %v675 = vsub.s32 0, %v674
    %v676 = vrot.slane %v671, %v675
    %v678 = vadd.f32 %v669, %v676
    %v679 = vadd.f32 %v670, %v676
    %v680 = vadd.f32 %v510, %v678
    %v681 = vadd.f32 %v511, %v679
    %s682 = scalar_lea.vmem %s10, 16
    %v683 = vld [vmem:[%s682] sm:$0xf]
    %v684 = vld [vmem:[%s682 + $0x4] sm:$0xf]
    %v685 = vld [vmem:[%s682 + $0x8] sm:$0xf]
    %v686 = vld [vmem:[%s682 + $0xc] sm:$0xf]
    %v687 = vpack.c.bf16 %v681, %v680
    %s688 = scalar_lea.vmem %s11, 1
    %v689 = vld [vmem:[%s688] sm:$0x1]
    %v691 = vlaneseq
    %v692 = vshrl.u32 %v691, 7
    %v693 = vsub.s32 0, %v692
    %v694 = vrot.slane %v689, %v693
    %v700 = vunpack.c.l.b16 %v683
    %v701 = vunpack.c.l.b16 %v684
    %v702 = vunpack.c.l.b16 %v685
    %v703 = vunpack.c.l.b16 %v686
    %v704 = vpack.c.b16 %v701, %v700
    %v705 = vpack.c.b16 %v703, %v702
    %v709 = vsel %vm99, %v687, 0
    %711 = vmatprep.subr.bf16.mxu0 0
    %712 = vmatpush1.bf16.msra.mxu0 0
    %713 = vmatprep.subr.bf16.mxu0 0
    %714 = vmatpush1.bf16.msra.mxu0 0
    %715 = vmatprep.subr.bf16.mxu0 0
    %716 = vmatpush1.bf16.msra.mxu0 0
    %717 = vmatprep.subr.bf16.mxu0 0
    %718 = vmatpush1.bf16.msra.mxu0 0
    %719 = vmatprep.subr.bf16.mxu0 0
    %720 = vmatpush1.bf16.msra.mxu0 0
    %721 = vmatprep.subr.bf16.mxu0 0
    %722 = vmatpush1.bf16.msra.mxu0 0
    %723 = vmatprep.subr.bf16.mxu0 0
    %724 = vmatpush1.bf16.msra.mxu0 %v705
    %725 = vmatprep.subr.bf16.mxu0 0
    %726 = vmatpush1.bf16.msra.mxu0 %v704
    %727 = vmatprep.subr.bf16.mxu0 0
    %728 = vmatpush2.bf16.msra.mxu0 0
    %729 = vmatprep.subr.bf16.mxu0 0
    %730 = vmatpush2.bf16.msra.mxu0 0
    %731 = vmatprep.subr.bf16.mxu0 0
    %732 = vmatpush2.bf16.msra.mxu0 0
    %733 = vmatprep.subr.bf16.mxu0 0
    %734 = vmatpush2.bf16.msra.mxu0 0
    %735 = vmatprep.subr.bf16.mxu0 0
    %736 = vmatpush2.bf16.msra.mxu0 0
    %737 = vmatprep.subr.bf16.mxu0 0
    %738 = vmatpush2.bf16.msra.mxu0 0
    %739 = vmatprep.subr.bf16.mxu0 0
    %740 = vmatpush2.bf16.msra.mxu0 0
    %741 = vmatprep.subr.bf16.mxu0 0
    %742 = vmatpush2.bf16.msra.mxu0 0
    %743 = vmatprep.mubr.bf16.mxu0 0
    %744 = vmatmul.mubr.bf16.gmra.mxu0 %v709
    %v745 = vpop.f32.mrf.mxu0
    %v746 = vadd.f32 %v694, %v745
    %v747 = vpop.f32.mrf.mxu0
    %v748 = vpop.f32.mrf.mxu0
    %v749 = vadd.f32 %v694, %v748
    %v750 = vpop.f32.mrf.mxu0
    %751 = vdwg.mxu0
    %753 = vset.pattern.permute.xlu0 1
    %754 = vperm.xlu0 %753, %v746
    %v755 = vpop.permute.xlu0 %754
    %758 = vset.pattern.permute.xlu0 1
    %759 = vperm.xlu0 %758, %v749
    %v760 = vpop.permute.xlu0 %759
    %v762 = vmul.f32 %v755, %v73
    %v763 = vmul.f32 %v760, %v74
    %v764 = vsel %vm148, %v762, 0.0
    %v765 = vsel %vm148, %v763, 0.0
    %v766 = vadd.f32 %v764, %v765
    %v767 = vrot.slane %v766, 4
    %v768 = vadd.f32 %v766, %v767
    %v769 = vrot.slane %v768, 2
    %v770 = vadd.f32 %v768, %v769
    %v771 = vrot.slane %v770, 1
    %v772 = vadd.f32 %v770, %v771
    %773 = vset.pattern.permute.xlu0 2
    %774 = vperm.xlu0 %773, %v746
    %v775 = vpop.permute.xlu0 %774
    %777 = vset.pattern.permute.xlu0 2
    %778 = vperm.xlu0 %777, %v749
    %v779 = vpop.permute.xlu0 %778
    %v781 = vmul.f32 %v775, %v73
    %v782 = vmul.f32 %v779, %v74
    %v783 = vsel %vm148, %v781, 0.0
    %v784 = vsel %vm148, %v782, 0.0
    %v785 = vadd.f32 %v783, %v784
    %v786 = vrot.slane %v785, 4
    %v787 = vadd.f32 %v785, %v786
    %v788 = vrot.slane %v787, 2
    %v789 = vadd.f32 %v787, %v788
    %v790 = vrot.slane %v789, 1
    %v791 = vadd.f32 %v789, %v790
    %792 = vset.pattern.permute.xlu0 0
    %793 = vperm.xlu0 %792, %v746
    %v794 = vpop.permute.xlu0 %793
    %796 = vset.pattern.permute.xlu0 0
    %797 = vperm.xlu0 %796, %v749
    %v798 = vpop.permute.xlu0 %797
    %v800 = vmul.f32 %v794, %v772
    %v801 = vmul.f32 %v798, %v772
    %v802 = vadd.f32 %v800, %v71
    %v803 = vadd.f32 %v801, %v72
    %v804 = vsel %vm148, %v802, -inf
    %805 = vmax.xlane.f32.xlu0 %v804
    %v806 = vpop.xlane.xlu0 %805
    %v807 = vsel %vm148, %v803, -inf
    %808 = vmax.xlane.f32.xlu0 %v807
    %v809 = vpop.xlane.xlu0 %808
    %v810 = vsub.f32 %v802, %v806
    %v811 = vsub.f32 %v803, %v809
    %v812 = vmul.f32 %v810, 1.442695
    %v813 = vpow.pop %v812
    %v814 = vmul.f32 %v811, 1.442695
    %v815 = vpow.pop %v814
    %v816 = vsel %vm148, %v813, 0.0
    %817 = vadd.xlane.f32.xlu0 %v816
    %v818 = vpop.xlane.xlu0 %817
    %v819 = vsel %vm148, %v815, 0.0
    %820 = vadd.xlane.f32.xlu0 %v819
    %v821 = vpop.xlane.xlu0 %820
    %v822 = vrcp.pop %v818
    %v823 = vrcp.pop %v821
    %v824 = vmul.f32 %v813, %v822
    %v825 = vmul.f32 %v815, %v823
    %v826 = vmul.f32 %v824, %v791
    %v827 = vmul.f32 %v825, %v791
    %v828 = vsel %vm148, %v826, 0.0
    %829 = vadd.xlane.f32.xlu0 %v828
    %v830 = vpop.xlane.xlu0 %829
    %v831 = vsel %vm148, %v827, 0.0
    %832 = vadd.xlane.f32.xlu0 %v831
    %v833 = vpop.xlane.xlu0 %832
    %s834 = scalar_lea.vmem %s12, 1
    %v835 = vld [vmem:[%s834] sm:$0x1]
    %v837 = vlaneseq
    %v838 = vshrl.u32 %v837, 7
    %v839 = vsub.s32 0, %v838
    %v840 = vrot.slane %v835, %v839
    %v842 = vmul.f32 %v830, %v840
    %v843 = vmul.f32 %v833, %v840
    %s844 = scalar_lea.vmem %s13, 1
    %v845 = vld [vmem:[%s844] sm:$0x1]
    %v847 = vlaneseq
    %v848 = vshrl.u32 %v847, 7
    %v849 = vsub.s32 0, %v848
    %v850 = vrot.slane %v845, %v849
    %v852 = vadd.f32 %v842, %v850
    %v853 = vadd.f32 %v843, %v850
    %v854 = vadd.f32 %v680, %v852
    %v855 = vadd.f32 %v681, %v853
    %s856 = scalar_lea.vmem %s10, 32
    %v857 = vld [vmem:[%s856] sm:$0xf]
    %v858 = vld [vmem:[%s856 + $0x4] sm:$0xf]
    %v859 = vld [vmem:[%s856 + $0x8] sm:$0xf]
    %v860 = vld [vmem:[%s856 + $0xc] sm:$0xf]
    %v861 = vpack.c.bf16 %v855, %v854
    %s862 = scalar_lea.vmem %s11, 2
    %v863 = vld [vmem:[%s862] sm:$0x1]
    %v865 = vlaneseq
    %v866 = vshrl.u32 %v865, 7
    %v867 = vsub.s32 0, %v866
    %v868 = vrot.slane %v863, %v867
    %v874 = vunpack.c.l.b16 %v857
    %v875 = vunpack.c.l.b16 %v858
    %v876 = vunpack.c.l.b16 %v859
    %v877 = vunpack.c.l.b16 %v860
    %v878 = vpack.c.b16 %v875, %v874
    %v879 = vpack.c.b16 %v877, %v876
    %v883 = vsel %vm99, %v861, 0
    %885 = vmatprep.subr.bf16.mxu0 0
    %886 = vmatpush1.bf16.msra.mxu0 0
    %887 = vmatprep.subr.bf16.mxu0 0
    %888 = vmatpush1.bf16.msra.mxu0 0
    %889 = vmatprep.subr.bf16.mxu0 0
    %890 = vmatpush1.bf16.msra.mxu0 0
    %891 = vmatprep.subr.bf16.mxu0 0
    %892 = vmatpush1.bf16.msra.mxu0 0
    %893 = vmatprep.subr.bf16.mxu0 0
    %894 = vmatpush1.bf16.msra.mxu0 0
    %895 = vmatprep.subr.bf16.mxu0 0
    %896 = vmatpush1.bf16.msra.mxu0 0
    %897 = vmatprep.subr.bf16.mxu0 0
    %898 = vmatpush1.bf16.msra.mxu0 %v879
    %899 = vmatprep.subr.bf16.mxu0 0
    %900 = vmatpush1.bf16.msra.mxu0 %v878
    %901 = vmatprep.subr.bf16.mxu0 0
    %902 = vmatpush2.bf16.msra.mxu0 0
    %903 = vmatprep.subr.bf16.mxu0 0
    %904 = vmatpush2.bf16.msra.mxu0 0
    %905 = vmatprep.subr.bf16.mxu0 0
    %906 = vmatpush2.bf16.msra.mxu0 0
    %907 = vmatprep.subr.bf16.mxu0 0
    %908 = vmatpush2.bf16.msra.mxu0 0
    %909 = vmatprep.subr.bf16.mxu0 0
    %910 = vmatpush2.bf16.msra.mxu0 0
    %911 = vmatprep.subr.bf16.mxu0 0
    %912 = vmatpush2.bf16.msra.mxu0 0
    %913 = vmatprep.subr.bf16.mxu0 0
    %914 = vmatpush2.bf16.msra.mxu0 0
    %915 = vmatprep.subr.bf16.mxu0 0
    %916 = vmatpush2.bf16.msra.mxu0 0
    %917 = vmatprep.mubr.bf16.mxu0 0
    %918 = vmatmul.mubr.bf16.gmra.mxu0 %v883
    %v919 = vpop.f32.mrf.mxu0
    %v920 = vadd.f32 %v868, %v919
    %v921 = vpop.f32.mrf.mxu0
    %v922 = vpop.f32.mrf.mxu0
    %v923 = vadd.f32 %v868, %v922
    %v924 = vpop.f32.mrf.mxu0
    %925 = vdwg.mxu0
    %927 = vset.pattern.permute.xlu0 1
    %928 = vperm.xlu0 %927, %v920
    %v929 = vpop.permute.xlu0 %928
    %932 = vset.pattern.permute.xlu0 1
    %933 = vperm.xlu0 %932, %v923
    %v934 = vpop.permute.xlu0 %933
    %v936 = vmul.f32 %v929, %v73
    %v937 = vmul.f32 %v934, %v74
    %v938 = vsel %vm148, %v936, 0.0
    %v939 = vsel %vm148, %v937, 0.0
    %v940 = vadd.f32 %v938, %v939
    %v941 = vrot.slane %v940, 4
    %v942 = vadd.f32 %v940, %v941
    %v943 = vrot.slane %v942, 2
    %v944 = vadd.f32 %v942, %v943
    %v945 = vrot.slane %v944, 1
    %v946 = vadd.f32 %v944, %v945
    %947 = vset.pattern.permute.xlu0 2
    %948 = vperm.xlu0 %947, %v920
    %v949 = vpop.permute.xlu0 %948
    %951 = vset.pattern.permute.xlu0 2
    %952 = vperm.xlu0 %951, %v923
    %v953 = vpop.permute.xlu0 %952
    %v955 = vmul.f32 %v949, %v73
    %v956 = vmul.f32 %v953, %v74
    %v957 = vsel %vm148, %v955, 0.0
    %v958 = vsel %vm148, %v956, 0.0
    %v959 = vadd.f32 %v957, %v958
    %v960 = vrot.slane %v959, 4
    %v961 = vadd.f32 %v959, %v960
    %v962 = vrot.slane %v961, 2
    %v963 = vadd.f32 %v961, %v962
    %v964 = vrot.slane %v963, 1
    %v965 = vadd.f32 %v963, %v964
    %966 = vset.pattern.permute.xlu0 0
    %967 = vperm.xlu0 %966, %v920
    %v968 = vpop.permute.xlu0 %967
    %970 = vset.pattern.permute.xlu0 0
    %971 = vperm.xlu0 %970, %v923
    %v972 = vpop.permute.xlu0 %971
    %v974 = vmul.f32 %v968, %v946
    %v975 = vmul.f32 %v972, %v946
    %v976 = vadd.f32 %v974, %v71
    %v977 = vadd.f32 %v975, %v72
    %v978 = vsel %vm148, %v976, -inf
    %979 = vmax.xlane.f32.xlu0 %v978
    %v980 = vpop.xlane.xlu0 %979
    %v981 = vsel %vm148, %v977, -inf
    %982 = vmax.xlane.f32.xlu0 %v981
    %v983 = vpop.xlane.xlu0 %982
    %v984 = vsub.f32 %v976, %v980
    %v985 = vsub.f32 %v977, %v983
    %v986 = vmul.f32 %v984, 1.442695
    %v987 = vpow.pop %v986
    %v988 = vmul.f32 %v985, 1.442695
    %v989 = vpow.pop %v988
    %v990 = vsel %vm148, %v987, 0.0
    %991 = vadd.xlane.f32.xlu0 %v990
    %v992 = vpop.xlane.xlu0 %991
    %v993 = vsel %vm148, %v989, 0.0
    %994 = vadd.xlane.f32.xlu0 %v993
    %v995 = vpop.xlane.xlu0 %994
    %v996 = vrcp.pop %v992
    %v997 = vrcp.pop %v995
    %v998 = vmul.f32 %v987, %v996
    %v999 = vmul.f32 %v989, %v997
    %v1000 = vmul.f32 %v998, %v965
    %v1001 = vmul.f32 %v999, %v965
    %v1002 = vsel %vm148, %v1000, 0.0
    %1003 = vadd.xlane.f32.xlu0 %v1002
    %v1004 = vpop.xlane.xlu0 %1003
    %v1005 = vsel %vm148, %v1001, 0.0
    %1006 = vadd.xlane.f32.xlu0 %v1005
    %v1007 = vpop.xlane.xlu0 %1006
    %s1008 = scalar_lea.vmem %s12, 2
    %v1009 = vld [vmem:[%s1008] sm:$0x1]
    %v1011 = vlaneseq
    %v1012 = vshrl.u32 %v1011, 7
    %v1013 = vsub.s32 0, %v1012
    %v1014 = vrot.slane %v1009, %v1013
    %v1016 = vmul.f32 %v1004, %v1014
    %v1017 = vmul.f32 %v1007, %v1014
    %s1018 = scalar_lea.vmem %s13, 2
    %v1019 = vld [vmem:[%s1018] sm:$0x1]
    %v1021 = vlaneseq
    %v1022 = vshrl.u32 %v1021, 7
    %v1023 = vsub.s32 0, %v1022
    %v1024 = vrot.slane %v1019, %v1023
    %v1026 = vadd.f32 %v1016, %v1024
    %v1027 = vadd.f32 %v1017, %v1024
    %v1028 = vadd.f32 %v854, %v1026
    %v1029 = vadd.f32 %v855, %v1027
    %s1030 = scalar_lea.vmem %s10, 48
    %v1031 = vld [vmem:[%s1030] sm:$0xf]
    %v1032 = vld [vmem:[%s1030 + $0x4] sm:$0xf]
    %v1033 = vld [vmem:[%s1030 + $0x8] sm:$0xf]
    %v1034 = vld [vmem:[%s1030 + $0xc] sm:$0xf]
    %v1035 = vpack.c.bf16 %v1029, %v1028
    %s1036 = scalar_lea.vmem %s11, 3
    %v1037 = vld [vmem:[%s1036] sm:$0x1]
    %v1039 = vlaneseq
    %v1040 = vshrl.u32 %v1039, 7
    %v1041 = vsub.s32 0, %v1040
    %v1042 = vrot.slane %v1037, %v1041
    %v1048 = vunpack.c.l.b16 %v1031
    %v1049 = vunpack.c.l.b16 %v1032
    %v1050 = vunpack.c.l.b16 %v1033
    %v1051 = vunpack.c.l.b16 %v1034
    %v1052 = vpack.c.b16 %v1049, %v1048
    %v1053 = vpack.c.b16 %v1051, %v1050
    %v1057 = vsel %vm99, %v1035, 0
    %1059 = vmatprep.subr.bf16.mxu0 0
    %1060 = vmatpush1.bf16.msra.mxu0 0
    %1061 = vmatprep.subr.bf16.mxu0 0
    %1062 = vmatpush1.bf16.msra.mxu0 0
    %1063 = vmatprep.subr.bf16.mxu0 0
    %1064 = vmatpush1.bf16.msra.mxu0 0
    %1065 = vmatprep.subr.bf16.mxu0 0
    %1066 = vmatpush1.bf16.msra.mxu0 0
    %1067 = vmatprep.subr.bf16.mxu0 0
    %1068 = vmatpush1.bf16.msra.mxu0 0
    %1069 = vmatprep.subr.bf16.mxu0 0
    %1070 = vmatpush1.bf16.msra.mxu0 0
    %1071 = vmatprep.subr.bf16.mxu0 0
    %1072 = vmatpush1.bf16.msra.mxu0 %v1053
    %1073 = vmatprep.subr.bf16.mxu0 0
    %1074 = vmatpush1.bf16.msra.mxu0 %v1052
    %1075 = vmatprep.subr.bf16.mxu0 0
    %1076 = vmatpush2.bf16.msra.mxu0 0
    %1077 = vmatprep.subr.bf16.mxu0 0
    %1078 = vmatpush2.bf16.msra.mxu0 0
    %1079 = vmatprep.subr.bf16.mxu0 0
    %1080 = vmatpush2.bf16.msra.mxu0 0
    %1081 = vmatprep.subr.bf16.mxu0 0
    %1082 = vmatpush2.bf16.msra.mxu0 0
    %1083 = vmatprep.subr.bf16.mxu0 0
    %1084 = vmatpush2.bf16.msra.mxu0 0
    %1085 = vmatprep.subr.bf16.mxu0 0
    %1086 = vmatpush2.bf16.msra.mxu0 0
    %1087 = vmatprep.subr.bf16.mxu0 0
    %1088 = vmatpush2.bf16.msra.mxu0 0
    %1089 = vmatprep.subr.bf16.mxu0 0
    %1090 = vmatpush2.bf16.msra.mxu0 0
    %1091 = vmatprep.mubr.bf16.mxu0 0
    %1092 = vmatmul.mubr.bf16.gmra.mxu0 %v1057
    %v1093 = vpop.f32.mrf.mxu0
    %v1094 = vadd.f32 %v1042, %v1093
    %v1095 = vpop.f32.mrf.mxu0
    %v1096 = vpop.f32.mrf.mxu0
    %v1097 = vadd.f32 %v1042, %v1096
    %v1098 = vpop.f32.mrf.mxu0
    %1099 = vdwg.mxu0
    %1101 = vset.pattern.permute.xlu0 1
    %1102 = vperm.xlu0 %1101, %v1094
    %v1103 = vpop.permute.xlu0 %1102
    %1106 = vset.pattern.permute.xlu0 1
    %1107 = vperm.xlu0 %1106, %v1097
    %v1108 = vpop.permute.xlu0 %1107
    %v1110 = vmul.f32 %v1103, %v73
    %v1111 = vmul.f32 %v1108, %v74
    %v1112 = vsel %vm148, %v1110, 0.0
    %v1113 = vsel %vm148, %v1111, 0.0
    %v1114 = vadd.f32 %v1112, %v1113
    %v1115 = vrot.slane %v1114, 4
    %v1116 = vadd.f32 %v1114, %v1115
    %v1117 = vrot.slane %v1116, 2
    %v1118 = vadd.f32 %v1116, %v1117
    %v1119 = vrot.slane %v1118, 1
    %v1120 = vadd.f32 %v1118, %v1119
    %1121 = vset.pattern.permute.xlu0 2
    %1122 = vperm.xlu0 %1121, %v1094
    %v1123 = vpop.permute.xlu0 %1122
    %1125 = vset.pattern.permute.xlu0 2
    %1126 = vperm.xlu0 %1125, %v1097
    %v1127 = vpop.permute.xlu0 %1126
    %v1129 = vmul.f32 %v1123, %v73
    %v1130 = vmul.f32 %v1127, %v74
    %v1131 = vsel %vm148, %v1129, 0.0
    %v1132 = vsel %vm148, %v1130, 0.0
    %v1133 = vadd.f32 %v1131, %v1132
    %v1134 = vrot.slane %v1133, 4
    %v1135 = vadd.f32 %v1133, %v1134
    %v1136 = vrot.slane %v1135, 2
    %v1137 = vadd.f32 %v1135, %v1136
    %v1138 = vrot.slane %v1137, 1
    %v1139 = vadd.f32 %v1137, %v1138
    %1140 = vset.pattern.permute.xlu0 0
    %1141 = vperm.xlu0 %1140, %v1094
    %v1142 = vpop.permute.xlu0 %1141
    %1144 = vset.pattern.permute.xlu0 0
    %1145 = vperm.xlu0 %1144, %v1097
    %v1146 = vpop.permute.xlu0 %1145
    %v1148 = vmul.f32 %v1142, %v1120
    %v1149 = vmul.f32 %v1146, %v1120
    %v1150 = vadd.f32 %v1148, %v71
    %v1151 = vadd.f32 %v1149, %v72
    %v1152 = vsel %vm148, %v1150, -inf
    %1153 = vmax.xlane.f32.xlu0 %v1152
    %v1154 = vpop.xlane.xlu0 %1153
    %v1155 = vsel %vm148, %v1151, -inf
    %1156 = vmax.xlane.f32.xlu0 %v1155
    %v1157 = vpop.xlane.xlu0 %1156
    %v1158 = vsub.f32 %v1150, %v1154
    %v1159 = vsub.f32 %v1151, %v1157
    %v1160 = vmul.f32 %v1158, 1.442695
    %v1161 = vpow.pop %v1160
    %v1162 = vmul.f32 %v1159, 1.442695
    %v1163 = vpow.pop %v1162
    %v1164 = vsel %vm148, %v1161, 0.0
    %1165 = vadd.xlane.f32.xlu0 %v1164
    %v1166 = vpop.xlane.xlu0 %1165
    %v1167 = vsel %vm148, %v1163, 0.0
    %1168 = vadd.xlane.f32.xlu0 %v1167
    %v1169 = vpop.xlane.xlu0 %1168
    %v1170 = vrcp.pop %v1166
    %v1171 = vrcp.pop %v1169
    %v1172 = vmul.f32 %v1161, %v1170
    %v1173 = vmul.f32 %v1163, %v1171
    %v1174 = vmul.f32 %v1172, %v1139
    %v1175 = vmul.f32 %v1173, %v1139
    %v1176 = vsel %vm148, %v1174, 0.0
    %1177 = vadd.xlane.f32.xlu0 %v1176
    %v1178 = vpop.xlane.xlu0 %1177
    %v1179 = vsel %vm148, %v1175, 0.0
    %1180 = vadd.xlane.f32.xlu0 %v1179
    %v1181 = vpop.xlane.xlu0 %1180
    %s1182 = scalar_lea.vmem %s12, 3
    %v1183 = vld [vmem:[%s1182] sm:$0x1]
    %v1185 = vlaneseq
    %v1186 = vshrl.u32 %v1185, 7
    %v1187 = vsub.s32 0, %v1186
    %v1188 = vrot.slane %v1183, %v1187
    %v1190 = vmul.f32 %v1178, %v1188
    %v1191 = vmul.f32 %v1181, %v1188
    %s1192 = scalar_lea.vmem %s13, 3
    %v1193 = vld [vmem:[%s1192] sm:$0x1]
    %v1195 = vlaneseq
    %v1196 = vshrl.u32 %v1195, 7
    %v1197 = vsub.s32 0, %v1196
    %v1198 = vrot.slane %v1193, %v1197
    %v1200 = vadd.f32 %v1190, %v1198
    %v1201 = vadd.f32 %v1191, %v1198
    %v1202 = vadd.f32 %v1028, %v1200
    %v1203 = vadd.f32 %v1029, %v1201
    %v1204 = vld [vmem:[%s14] sm:$0xf]
    %v1205 = vld [vmem:[%s14 + $0x4] sm:$0xf]
    %v1206 = vld [vmem:[%s14 + $0x8] sm:$0xf]
    %v1207 = vld [vmem:[%s14 + $0xc] sm:$0xf]
    %v1208 = vpack.c.bf16 %v1203, %v1202
    %v1209 = vld [vmem:[%s15] sm:$0x1]
    %v1211 = vlaneseq
    %v1212 = vshrl.u32 %v1211, 7
    %v1213 = vsub.s32 0, %v1212
    %v1214 = vrot.slane %v1209, %v1213
    %v1220 = vunpack.c.l.b16 %v1204
    %v1221 = vunpack.c.l.b16 %v1205
    %v1222 = vunpack.c.l.b16 %v1206
    %v1223 = vunpack.c.l.b16 %v1207
    %v1224 = vpack.c.b16 %v1221, %v1220
    %v1225 = vpack.c.b16 %v1223, %v1222
    %v1229 = vsel %vm99, %v1208, 0
    %1231 = vmatprep.subr.bf16.mxu0 0
    %1232 = vmatpush1.bf16.msra.mxu0 0
    %1233 = vmatprep.subr.bf16.mxu0 0
    %1234 = vmatpush1.bf16.msra.mxu0 0
    %1235 = vmatprep.subr.bf16.mxu0 0
    %1236 = vmatpush1.bf16.msra.mxu0 0
    %1237 = vmatprep.subr.bf16.mxu0 0
    %1238 = vmatpush1.bf16.msra.mxu0 0
    %1239 = vmatprep.subr.bf16.mxu0 0
    %1240 = vmatpush1.bf16.msra.mxu0 0
    %1241 = vmatprep.subr.bf16.mxu0 0
    %1242 = vmatpush1.bf16.msra.mxu0 0
    %1243 = vmatprep.subr.bf16.mxu0 0
    %1244 = vmatpush1.bf16.msra.mxu0 %v1225
    %1245 = vmatprep.subr.bf16.mxu0 0
    %1246 = vmatpush1.bf16.msra.mxu0 %v1224
    %1247 = vmatprep.subr.bf16.mxu0 0
    %1248 = vmatpush2.bf16.msra.mxu0 0
    %1249 = vmatprep.subr.bf16.mxu0 0
    %1250 = vmatpush2.bf16.msra.mxu0 0
    %1251 = vmatprep.subr.bf16.mxu0 0
    %1252 = vmatpush2.bf16.msra.mxu0 0
    %1253 = vmatprep.subr.bf16.mxu0 0
    %1254 = vmatpush2.bf16.msra.mxu0 0
    %1255 = vmatprep.subr.bf16.mxu0 0
    %1256 = vmatpush2.bf16.msra.mxu0 0
    %1257 = vmatprep.subr.bf16.mxu0 0
    %1258 = vmatpush2.bf16.msra.mxu0 0
    %1259 = vmatprep.subr.bf16.mxu0 0
    %1260 = vmatpush2.bf16.msra.mxu0 0
    %1261 = vmatprep.subr.bf16.mxu0 0
    %1262 = vmatpush2.bf16.msra.mxu0 0
    %1263 = vmatprep.mubr.bf16.mxu0 0
    %1264 = vmatmul.mubr.bf16.gmra.mxu0 %v1229
    %v1265 = vpop.f32.mrf.mxu0
    %v1266 = vadd.f32 %v1214, %v1265
    %v1267 = vpop.f32.mrf.mxu0
    %v1268 = vpop.f32.mrf.mxu0
    %v1269 = vadd.f32 %v1214, %v1268
    %v1270 = vpop.f32.mrf.mxu0
    %1271 = vdwg.mxu0
    %v1272 = vmul.f32 %v1266, 0.5
    %v1273 = vmul.f32 %v1269, 0.5
    %v1274 = vmul.f32 %v1266, 0.044715
    %v1275 = vmul.f32 %v1269, 0.044715
    %v1276 = vmul.f32 %v1274, %v1266
    %v1277 = vmul.f32 %v1275, %v1269
    %v1278 = vmul.f32 %v1276, %v1266
    %v1279 = vmul.f32 %v1277, %v1269
    %v1280 = vadd.f32 %v1266, %v1278
    %v1281 = vadd.f32 %v1269, %v1279
    %v1282 = vmul.f32 %v1280, 0.7978846
    %v1283 = vmul.f32 %v1281, 0.7978846
    %v1284 = vtanh.pop %v1282
    %v1285 = vtanh.pop %v1283
    %v1286 = vadd.f32 %v1284, 1.0
    %v1287 = vadd.f32 %v1285, 1.0
    %v1288 = vmul.f32 %v1272, %v1286
    %v1289 = vmul.f32 %v1273, %v1287
    %v1290 = vld [vmem:[%s16] sm:$0xf]
    %v1291 = vld [vmem:[%s16 + $0x4] sm:$0xf]
    %v1292 = vld [vmem:[%s16 + $0x8] sm:$0xf]
    %v1293 = vld [vmem:[%s16 + $0xc] sm:$0xf]
    %v1294 = vld [vmem:[%s16 + $0x10] sm:$0xf]
    %v1295 = vld [vmem:[%s16 + $0x14] sm:$0xf]
    %v1296 = vld [vmem:[%s16 + $0x18] sm:$0xf]
    %v1297 = vld [vmem:[%s16 + $0x1c] sm:$0xf]
    %v1298 = vld [vmem:[%s16 + $0x20] sm:$0xf]
    %v1299 = vld [vmem:[%s16 + $0x24] sm:$0xf]
    %v1300 = vld [vmem:[%s16 + $0x28] sm:$0xf]
    %v1301 = vld [vmem:[%s16 + $0x2c] sm:$0xf]
    %v1302 = vld [vmem:[%s16 + $0x30] sm:$0xf]
    %v1303 = vld [vmem:[%s16 + $0x34] sm:$0xf]
    %v1304 = vld [vmem:[%s16 + $0x38] sm:$0xf]
    %v1305 = vld [vmem:[%s16 + $0x3c] sm:$0xf]
    %v1306 = vpack.c.bf16 %v1289, %v1288
    %v1307 = vld [vmem:[%s17] sm:$0x1]
    %v1309 = vlaneseq
    %v1310 = vshrl.u32 %v1309, 7
    %v1311 = vsub.s32 0, %v1310
    %v1312 = vrot.slane %v1307, %v1311
    %v1330 = vunpack.c.l.b16 %v1290
    %v1331 = vunpack.c.l.b16 %v1291
    %v1332 = vunpack.c.l.b16 %v1292
    %v1333 = vunpack.c.l.b16 %v1293
    %v1334 = vunpack.c.l.b16 %v1294
    %v1335 = vunpack.c.l.b16 %v1295
    %v1336 = vunpack.c.l.b16 %v1296
    %v1337 = vunpack.c.l.b16 %v1297
    %v1338 = vunpack.c.l.b16 %v1298
    %v1339 = vunpack.c.l.b16 %v1299
    %v1340 = vunpack.c.l.b16 %v1300
    %v1341 = vunpack.c.l.b16 %v1301
    %v1342 = vunpack.c.l.b16 %v1302
    %v1343 = vunpack.c.l.b16 %v1303
    %v1344 = vunpack.c.l.b16 %v1304
    %v1345 = vunpack.c.l.b16 %v1305
    %v1346 = vpack.c.b16 %v1331, %v1330
    %v1347 = vpack.c.b16 %v1333, %v1332
    %v1348 = vpack.c.b16 %v1335, %v1334
    %v1349 = vpack.c.b16 %v1337, %v1336
    %v1350 = vpack.c.b16 %v1339, %v1338
    %v1351 = vpack.c.b16 %v1341, %v1340
    %v1352 = vpack.c.b16 %v1343, %v1342
    %v1353 = vpack.c.b16 %v1345, %v1344
    %1362 = vmatprep.subr.bf16.mxu0 0
    %1363 = vmatpush1.bf16.msra.mxu0 %v1353
    %1364 = vmatprep.subr.bf16.mxu0 0
    %1365 = vmatpush1.bf16.msra.mxu0 %v1352
    %1366 = vmatprep.subr.bf16.mxu0 0
    %1367 = vmatpush1.bf16.msra.mxu0 %v1351
    %1368 = vmatprep.subr.bf16.mxu0 0
    %1369 = vmatpush1.bf16.msra.mxu0 %v1350
    %1370 = vmatprep.subr.bf16.mxu0 0
    %1371 = vmatpush1.bf16.msra.mxu0 %v1349
    %1372 = vmatprep.subr.bf16.mxu0 0
    %1373 = vmatpush1.bf16.msra.mxu0 %v1348
    %1374 = vmatprep.subr.bf16.mxu0 0
    %1375 = vmatpush1.bf16.msra.mxu0 %v1347
    %1376 = vmatprep.subr.bf16.mxu0 0
    %1377 = vmatpush1.bf16.msra.mxu0 %v1346
    %1378 = vmatprep.subr.bf16.mxu0 0
    %1379 = vmatpush2.bf16.msra.mxu0 0
    %1380 = vmatprep.subr.bf16.mxu0 0
    %1381 = vmatpush2.bf16.msra.mxu0 0
    %1382 = vmatprep.subr.bf16.mxu0 0
    %1383 = vmatpush2.bf16.msra.mxu0 0
    %1384 = vmatprep.subr.bf16.mxu0 0
    %1385 = vmatpush2.bf16.msra.mxu0 0
    %1386 = vmatprep.subr.bf16.mxu0 0
    %1387 = vmatpush2.bf16.msra.mxu0 0
    %1388 = vmatprep.subr.bf16.mxu0 0
    %1389 = vmatpush2.bf16.msra.mxu0 0
    %1390 = vmatprep.subr.bf16.mxu0 0
    %1391 = vmatpush2.bf16.msra.mxu0 0
    %1392 = vmatprep.subr.bf16.mxu0 0
    %1393 = vmatpush2.bf16.msra.mxu0 0
    %1394 = vmatprep.mubr.bf16.mxu0 0
    %1395 = vmatmul.mubr.bf16.gmra.mxu0 %v1306
    %v1396 = vpop.f32.mrf.mxu0
    %v1397 = vadd.f32 %v1312, %v1396
    %v1398 = vpop.f32.mrf.mxu0
    %v1399 = vpop.f32.mrf.mxu0
    %v1400 = vadd.f32 %v1312, %v1399
    %v1401 = vpop.f32.mrf.mxu0
    %1402 = vdwg.mxu0
    %v1403 = vadd.f32 %v1397, %v1202
    %v1404 = vadd.f32 %v1400, %v1203
    %v1405 = vld [vmem:[%s18] sm:$0x1]
    %v1406 = vld [vmem:[%s19] sm:$0x1]
    %v1407 = vsel %vm99, %v1403, 0.0
    %1408 = vadd.xlane.f32.xlu0 %v1407
    %v1409 = vpop.xlane.xlu0 %1408
    %v1410 = vsel %vm99, %v1404, 0.0
    %1411 = vadd.xlane.f32.xlu0 %v1410
    %v1412 = vpop.xlane.xlu0 %1411
    %v1413 = vmul.f32 %v1409, %v475
    %v1414 = vmul.f32 %v1412, %v475
    %v1415 = vsub.f32 %v1403, %v1413
    %v1416 = vsub.f32 %v1404, %v1414
    %v1417 = vmul.f32 %v1415, %v1415
    %v1418 = vmul.f32 %v1416, %v1416
    %v1419 = vsel %vm99, %v1417, 0.0
    %1420 = vadd.xlane.f32.xlu0 %v1419
    %v1421 = vpop.xlane.xlu0 %1420
    %v1422 = vsel %vm99, %v1418, 0.0
    %1423 = vadd.xlane.f32.xlu0 %v1422
    %v1424 = vpop.xlane.xlu0 %1423
    %v1425 = vmul.f32 %v1421, %v475
    %v1426 = vmul.f32 %v1424, %v475
    %v1427 = vadd.f32 %v1425, 1e-12
    %v1428 = vadd.f32 %v1426, 1e-12
    %v1429 = vrsqrt.pop %v1427
    %v1430 = vrsqrt.pop %v1428
    %v1431 = vmul.f32 %v1415, %v1429
    %v1432 = vmul.f32 %v1416, %v1430
    %v1434 = vlaneseq
    %v1435 = vshrl.u32 %v1434, 7
    %v1436 = vsub.s32 0, %v1435
    %v1437 = vrot.slane %v1405, %v1436
    %v1439 = vmul.f32 %v1431, %v1437
    %v1440 = vmul.f32 %v1432, %v1437
    %v1442 = vlaneseq
    %v1443 = vshrl.u32 %v1442, 7
    %v1444 = vsub.s32 0, %v1443
    %v1445 = vrot.slane %v1406, %v1444
    %v1447 = vadd.f32 %v1439, %v1445
    %v1448 = vadd.f32 %v1440, %v1445
    %1449 = vst.msk [vmem:[#allocation2] sm:$0xff] %vm99, %v1447
    %1450 = vst.msk [vmem:[#allocation2 + $0x8] sm:$0xff] %vm99, %v1448
    // Predicated region
    $region82: #{roberta_layer_ada.1} parent=1 // pred_check
      _
    $region83: #{roberta_layer_ada.1} parent=1 // pred_check_branch
      %1452 = sbr.rel (0) target = $region85
    $region84: #{roberta_layer_ada.1} parent=1 // pred_region
      %s1454 = ssub.s32 256, 256
      %1455 = vsyncadd [#allocation3], %s1454
      %s1456 = sshll.u32 [#allocation2], 4
      %s1457 = int_to_ptr.vmem [resolvable:$true] %s1456
      %1462 = dma.vmem_to_hbm [thread:$0]  %s1457, 256, %s20, [#allocation3], 128, 128, 8
    $region85: #{roberta_layer_ada.1} parent=1 // pred_fallthru
      _
    // Predicated region
    $region86: #{roberta_layer_ada.1} parent=1 // pred_check
      _
    $region87: #{roberta_layer_ada.1} parent=1 // pred_check_branch
      %1464 = sbr.rel (0) target = $region89
    $region88: #{roberta_layer_ada.1} parent=1 // pred_region
      %1465 = dma.done [#allocation3], 256
    $region89: #{roberta_layer_ada.1} parent=1 // pred_fallthru
      _
    %1466 = vsyncpa [#allocation3], 1

</llo_original>
